<compile_context>
chip_gen: v5e
topology: v5e:2x2
jax: 0.10.0
libtpu: 0.0.40
codegen_flags: <defaults>
</compile_context>

<pallas_src>
import functools

import jax
import jax.numpy as jnp
from jax.experimental import pallas as pl
from jax.experimental.pallas import tpu as pltpu

HIDDEN = 768
EPS = 1e-12


def _bert_self_output_kernel(h_ref, res_ref, w_ref, p_ref, o_ref):
    # Dense on the MXU: bf16 operands, f32 accumulation.
    x = jnp.dot(
        h_ref[...].astype(jnp.bfloat16),
        w_ref[...],  # already bf16 [in, out]
        preferred_element_type=jnp.float32,
    )

    # Packed params: row 0 = bias, row 1 = gamma, row 2 = beta (all f32, [1, H]).
    bias = p_ref[0:1, :]
    gamma = p_ref[1:2, :]
    beta = p_ref[2:3, :]

    # Bias folded into the residual add (single fused epilogue pass).
    x = x + (res_ref[...].astype(jnp.float32) + bias)

    # BertLayerNorm (TF style: eps inside the sqrt, biased variance), f32 math.
    u = jnp.mean(x, axis=-1, keepdims=True)
    xc = x - u
    s = jnp.mean(xc * xc, axis=-1, keepdims=True)
    y = xc * jax.lax.rsqrt(s + EPS)  # rsqrt -> EUP slot, keeps VALU free

    o_ref[...] = (gamma * y + beta).astype(o_ref.dtype)


@functools.partial(jax.jit, static_argnames=("tm",))
def bert_self_output(hidden_states, input_tensor, w_t, b, gamma, beta, *, tm=512):
    """hidden_states, input_tensor: [B, S, H]; w_t: [H, H] ([in, out], i.e. W^T);
    b, gamma, beta: [H]."""
    B, S, H = hidden_states.shape
    assert H == HIDDEN
    n_tok = B * S

    # Effective token tile: at most `tm`, at least 8, multiple of 8; pad the token
    # axis so the grid divides evenly. Padded rows compute garbage and are sliced off.
    tm_eff = min(tm, ((n_tok + 7) // 8) * 8)
    n_pad = ((n_tok + tm_eff - 1) // tm_eff) * tm_eff

    h2 = hidden_states.reshape(n_tok, H)
    r2 = input_tensor.reshape(n_tok, H)
    if n_pad != n_tok:
        pad = ((0, n_pad - n_tok), (0, 0))
        h2 = jnp.pad(h2, pad)
        r2 = jnp.pad(r2, pad)

    # Weight pre-cast to bf16 for the MXU; params packed into one (3, H) f32 slab.
    w_bf16 = w_t.astype(jnp.bfloat16)
    params = jnp.stack(
        [b.astype(jnp.float32), gamma.astype(jnp.float32), beta.astype(jnp.float32)],
        axis=0,
    )  # (3, H)

    grid = (n_pad // tm_eff,)
    out = pl.pallas_call(
        _bert_self_output_kernel,
        out_shape=jax.ShapeDtypeStruct((n_pad, H), hidden_states.dtype),
        grid_spec=pltpu.PrefetchScalarGridSpec(
            num_scalar_prefetch=0,
            grid=grid,
            in_specs=[
                pl.BlockSpec((tm_eff, H), lambda i: (i, 0)),  # hidden_states tile
                pl.BlockSpec((tm_eff, H), lambda i: (i, 0)),  # residual tile
                pl.BlockSpec((H, H), lambda i: (0, 0)),       # weight (full, resident)
                pl.BlockSpec((3, H), lambda i: (0, 0)),       # packed bias/gamma/beta
            ],
            out_specs=pl.BlockSpec((tm_eff, H), lambda i: (i, 0)),
        ),
        compiler_params=pltpu.CompilerParams(
            dimension_semantics=("parallel",),
            vmem_limit_bytes=32 * 1024 * 1024,
        ),
    )(h2, r2, w_bf16, params)

    out = out[:n_tok]
    return out.reshape(B, S, H)


def reference(hidden_states, input_tensor, w_t, b, gamma, beta):
    x = jnp.einsum("bsh,hk->bsk", hidden_states, w_t) + b
    x = x + input_tensor
    u = jnp.mean(x, axis=-1, keepdims=True)
    s = jnp.mean((x - u) ** 2, axis=-1, keepdims=True)
    y = (x - u) / jnp.sqrt(s + EPS)
    return gamma * y + beta


if __name__ == "__main__":
    key = jax.random.PRNGKey(0)
    k1, k2, k3, k4 = jax.random.split(key, 4)

    B, S, H = 2, 8, HIDDEN  # hidden must be 768 to match nn.Linear(768, 768)

    hidden_states = jax.random.normal(k1, (B, S, H), dtype=jnp.float32)
    input_tensor = jax.random.normal(k2, (B, S, H), dtype=jnp.float32)

    # Deterministic parameter init (shapes from module __init__).
    # nn.Linear(768, 768): weight [out, in]; we pre-transpose to [in, out].
    w = jax.random.normal(k3, (H, H), dtype=jnp.float32) * 0.02
    w_t = w.T
    b = jax.random.normal(k4, (H,), dtype=jnp.float32) * 0.02
    gamma = jnp.ones((H,), dtype=jnp.float32)   # BertLayerNorm.weight
    beta = jnp.zeros((H,), dtype=jnp.float32)   # BertLayerNorm.bias

    out = bert_self_output(hidden_states, input_tensor, w_t, b, gamma, beta)
    out = jax.block_until_ready(out)

    ref = reference(hidden_states, input_tensor, w_t, b, gamma, beta)
    assert out.shape == (B, S, H)
    # Tolerance loosened vs the pure-f32 rev: matmul operands are bf16
    # (f32 accumulation + f32 LayerNorm bound the error).
    assert jnp.allclose(out, ref, atol=2e-2, rtol=2e-2), "mismatch vs reference"

    print("KERNEL_OK")
</pallas_src>

<mosaic_0001>
module attributes {stable_mosaic.version = 11 : i64} {
  func.func @_bert_self_output_kernel(%arg0: i32, %arg1: memref<16x768xf32, #tpu.memory_space<vmem>>, %arg2: memref<16x768xf32, #tpu.memory_space<vmem>>, %arg3: memref<768x768xbf16, #tpu.memory_space<vmem>>, %arg4: memref<3x768xf32, #tpu.memory_space<vmem>>, %arg5: memref<16x768xf32, #tpu.memory_space<vmem>>) attributes {dimension_semantics = [#tpu.dimension_semantics<parallel>], iteration_bounds = array<i64: 1>, scalar_prefetch = 0 : i64, scratch_operands = 0 : i64, tpu.core_type = #tpu.core_type<tc>, window_params = [{transform_indices = @transform_0, window_bounds = array<i64: 16, 768>}, {transform_indices = @transform_1, window_bounds = array<i64: 16, 768>}, {pipeline_mode = #tpu.pipeline_mode<synchronous>, transform_indices = @transform_2, window_bounds = array<i64: 768, 768>}, {pipeline_mode = #tpu.pipeline_mode<synchronous>, transform_indices = @transform_3, window_bounds = array<i64: 3, 768>}, {transform_indices = @transform_4, window_bounds = array<i64: 16, 768>}]} {
    %c0 = arith.constant 0 : index
    %c0_0 = arith.constant 0 : index
    %0 = vector.load %arg1[%c0, %c0_0] : memref<16x768xf32, #tpu.memory_space<vmem>>, vector<16x768xf32>
    %1 = arith.truncf %0 : vector<16x768xf32> to vector<16x768xbf16>
    %c0_1 = arith.constant 0 : index
    %c0_2 = arith.constant 0 : index
    %2 = vector.load %arg3[%c0_1, %c0_2] : memref<768x768xbf16, #tpu.memory_space<vmem>>, vector<768x768xbf16>
    %cst = arith.constant dense<0.000000e+00> : vector<16x768xf32>
    %3 = tpu.matmul %1, %2, %cst {dimension_numbers = #tpu.dot_dimension_numbers<[1], [0], [0], [1], [0, 0, 1, 1], [], []>} : vector<16x768xbf16>, vector<768x768xbf16>, vector<16x768xf32> -> vector<16x768xf32>
    %c0_3 = arith.constant 0 : index
    %c0_4 = arith.constant 0 : index
    %4 = vector.load %arg4[%c0_3, %c0_4] : memref<3x768xf32, #tpu.memory_space<vmem>>, vector<1x768xf32>
    %c1 = arith.constant 1 : index
    %c0_5 = arith.constant 0 : index
    %5 = vector.load %arg4[%c1, %c0_5] : memref<3x768xf32, #tpu.memory_space<vmem>>, vector<1x768xf32>
    %c2 = arith.constant 2 : index
    %c0_6 = arith.constant 0 : index
    %6 = vector.load %arg4[%c2, %c0_6] : memref<3x768xf32, #tpu.memory_space<vmem>>, vector<1x768xf32>
    %c0_7 = arith.constant 0 : index
    %c0_8 = arith.constant 0 : index
    %7 = vector.load %arg2[%c0_7, %c0_8] : memref<16x768xf32, #tpu.memory_space<vmem>>, vector<16x768xf32>
    %8 = vector.broadcast %4 : vector<1x768xf32> to vector<16x768xf32>
    %9 = arith.addf %7, %8 : vector<16x768xf32>
    %10 = arith.addf %3, %9 : vector<16x768xf32>
    %cst_9 = arith.constant dense<0.000000e+00> : vector<16xf32>
    %11 = vector.multi_reduction <add>, %10, %cst_9 [1] : vector<16x768xf32> to vector<16xf32>
    %12 = vector.shape_cast %11 : vector<16xf32> to vector<16x1xf32>
    %cst_10 = arith.constant 7.680000e+02 : f32
    %13 = vector.broadcast %cst_10 : f32 to vector<16x1xf32>
    %14 = arith.divf %12, %13 : vector<16x1xf32>
    %15 = vector.broadcast %14 : vector<16x1xf32> to vector<16x768xf32>
    %16 = arith.subf %10, %15 : vector<16x768xf32>
    %17 = arith.mulf %16, %16 : vector<16x768xf32>
    %cst_11 = arith.constant dense<0.000000e+00> : vector<16xf32>
    %18 = vector.multi_reduction <add>, %17, %cst_11 [1] : vector<16x768xf32> to vector<16xf32>
    %19 = vector.shape_cast %18 : vector<16xf32> to vector<16x1xf32>
    %cst_12 = arith.constant 7.680000e+02 : f32
    %20 = vector.broadcast %cst_12 : f32 to vector<16x1xf32>
    %21 = arith.divf %19, %20 : vector<16x1xf32>
    %cst_13 = arith.constant 9.99999996E-13 : f32
    %22 = vector.broadcast %cst_13 : f32 to vector<16x1xf32>
    %23 = arith.addf %21, %22 : vector<16x1xf32>
    %24 = math.rsqrt %23 : vector<16x1xf32>
    %25 = vector.broadcast %24 : vector<16x1xf32> to vector<16x768xf32>
    %26 = arith.mulf %16, %25 : vector<16x768xf32>
    %27 = vector.broadcast %5 : vector<1x768xf32> to vector<16x768xf32>
    %28 = arith.mulf %27, %26 : vector<16x768xf32>
    %29 = vector.broadcast %6 : vector<1x768xf32> to vector<16x768xf32>
    %30 = arith.addf %28, %29 : vector<16x768xf32>
    %c0_14 = arith.constant 0 : index
    %c0_15 = arith.constant 0 : index
    %31 = vector.load %arg5[%c0_14, %c0_15] : memref<16x768xf32, #tpu.memory_space<vmem>>, vector<16x768xf32>
    tpu.vector_store %arg5[%c0_14, %c0_15], %30 {strides = array<i32>} : memref<16x768xf32, #tpu.memory_space<vmem>>, vector<16x768xf32>,
    return
  }
  func.func @transform_0(%arg0: i32) -> (i32, i32) {
    %c0_i32 = arith.constant 0 : i32
    %c0_i32_0 = arith.constant 0 : i32
    return %arg0, %c0_i32 : i32, i32
  }
  func.func @transform_1(%arg0: i32) -> (i32, i32) {
    %c0_i32 = arith.constant 0 : i32
    %c0_i32_0 = arith.constant 0 : i32
    return %arg0, %c0_i32 : i32, i32
  }
  func.func @transform_2(%arg0: i32) -> (i32, i32) {
    %c0_i32 = arith.constant 0 : i32
    %c0_i32_0 = arith.constant 0 : i32
    %c0_i32_1 = arith.constant 0 : i32
    return %c0_i32, %c0_i32_0 : i32, i32
  }
  func.func @transform_3(%arg0: i32) -> (i32, i32) {
    %c0_i32 = arith.constant 0 : i32
    %c0_i32_0 = arith.constant 0 : i32
    %c0_i32_1 = arith.constant 0 : i32
    return %c0_i32, %c0_i32_0 : i32, i32
  }
  func.func @transform_4(%arg0: i32) -> (i32, i32) {
    %c0_i32 = arith.constant 0 : i32
    %c0_i32_0 = arith.constant 0 : i32
    return %arg0, %c0_i32 : i32, i32
  }
}

</mosaic_0001>

<llo_original>
// kernel: bert_self_output.1
$region0: #{bert_self_output.1}
  #allocation0 [shape = 'u32[]', space=smem, size = 0x4, offset = 0x4, fixed_abs, tag = 'smem constant byte address 0x4 - core index']
  #allocation1 [shape = 'u32[72,128]{1,0:T(1,128)}', space=vmem, size = 0x9000, scoped, tag = 'internal scratch']
  %s0 = inlined_call_operand.vmem [shape: f32[16,768], index: 0, kind: input, shape index: {}]
  %s1 = inlined_call_operand.vmem [shape: f32[16,768], index: 1, kind: input, shape index: {}]
  %s2 = inlined_call_operand.vmem [shape: bf16[768,768], index: 2, kind: input, shape index: {}]
  %s3 = inlined_call_operand.vmem [shape: f32[3,768], index: 3, kind: input, shape index: {}]
  %s4 = inlined_call_operand.hbm [shape: f32[16,768], index: 4, kind: output, shape index: {}]
  %s5 = sld [smem:[#allocation0]]
  $region26: #{bert_self_output.1} parent=0
    _
  %s7 = ssub.s32 1, %s5
  %s8 = scalar_select 0, %s7, %s5
  $region1: #{bert_self_output.1} parent=0
    #allocation2 [shape = 'u8[49152]{0}', space=vmem, size = 0xc000, scoped, tag = 'output window, operand 0, single buffered']
    #allocation3 [shape = 's32[1]{0}', space=sflag, size = 0x4, scoped, tag = 'scoped memory for bert_self_output.1']
    %9 = vsyncpa [#allocation3], 0
    // Predicated region
    $region2: #{bert_self_output.1} parent=1 // pred_check
      _
    $region3: #{bert_self_output.1} parent=1 // pred_check_branch
      %11 = sbr.rel (0) target = $region5
    $region4: #{bert_self_output.1} parent=1 // pred_region
      _
    $region5: #{bert_self_output.1} parent=1 // pred_fallthru
      _
    // Predicated region
    $region6: #{bert_self_output.1} parent=1 // pred_check
      _
    $region7: #{bert_self_output.1} parent=1 // pred_check_branch
      %13 = sbr.rel (0) target = $region9
    $region8: #{bert_self_output.1} parent=1 // pred_region
      _
    $region9: #{bert_self_output.1} parent=1 // pred_fallthru
      _
    // Predicated region
    $region10: #{bert_self_output.1} parent=1 // pred_check
      _
    $region11: #{bert_self_output.1} parent=1 // pred_check_branch
      %15 = sbr.rel (0) target = $region13
    $region12: #{bert_self_output.1} parent=1 // pred_region
      _
    $region13: #{bert_self_output.1} parent=1 // pred_fallthru
      _
    // Predicated region
    $region14: #{bert_self_output.1} parent=1 // pred_check
      _
    $region15: #{bert_self_output.1} parent=1 // pred_check_branch
      %17 = sbr.rel (0) target = $region17
    $region16: #{bert_self_output.1} parent=1 // pred_region
      _
    $region17: #{bert_self_output.1} parent=1 // pred_fallthru
      _
    %v18 = vld [vmem:[%s0] sm:$0xff]
    %v19 = vld [vmem:[%s0 + $0x8] sm:$0xff]
    %v20 = vld [vmem:[%s0 + $0x10] sm:$0xff]
    %v21 = vld [vmem:[%s0 + $0x18] sm:$0xff]
    %v22 = vld [vmem:[%s0 + $0x20] sm:$0xff]
    %v23 = vld [vmem:[%s0 + $0x28] sm:$0xff]
    %v24 = vld [vmem:[%s0 + $0x30] sm:$0xff]
    %v25 = vld [vmem:[%s0 + $0x38] sm:$0xff]
    %v26 = vld [vmem:[%s0 + $0x40] sm:$0xff]
    %v27 = vld [vmem:[%s0 + $0x48] sm:$0xff]
    %v28 = vld [vmem:[%s0 + $0x50] sm:$0xff]
    %v29 = vld [vmem:[%s0 + $0x58] sm:$0xff]
    %v30 = vpack.c.bf16 %v24, %v18
    %v31 = vpack.c.bf16 %v25, %v19
    %v32 = vpack.c.bf16 %v26, %v20
    %v33 = vpack.c.bf16 %v27, %v21
    %v34 = vpack.c.bf16 %v28, %v22
    %v35 = vpack.c.bf16 %v29, %v23
    %v36 = vld [vmem:[%s2] sm:$0xff]
    %v37 = vld [vmem:[%s2 + $0x8] sm:$0xff]
    %v38 = vld [vmem:[%s2 + $0x10] sm:$0xff]
    %v39 = vld [vmem:[%s2 + $0x18] sm:$0xff]
    %v40 = vld [vmem:[%s2 + $0x20] sm:$0xff]
    %v41 = vld [vmem:[%s2 + $0x28] sm:$0xff]
    %v42 = vld [vmem:[%s2 + $0x30] sm:$0xff]
    %v43 = vld [vmem:[%s2 + $0x38] sm:$0xff]
    %v44 = vld [vmem:[%s2 + $0x40] sm:$0xff]
    %v45 = vld [vmem:[%s2 + $0x48] sm:$0xff]
    %v46 = vld [vmem:[%s2 + $0x50] sm:$0xff]
    %v47 = vld [vmem:[%s2 + $0x58] sm:$0xff]
    %v48 = vld [vmem:[%s2 + $0x60] sm:$0xff]
    %v49 = vld [vmem:[%s2 + $0x68] sm:$0xff]
    %v50 = vld [vmem:[%s2 + $0x70] sm:$0xff]
    %v51 = vld [vmem:[%s2 + $0x78] sm:$0xff]
    %v52 = vld [vmem:[%s2 + $0x80] sm:$0xff]
    %v53 = vld [vmem:[%s2 + $0x88] sm:$0xff]
    %v54 = vld [vmem:[%s2 + $0x90] sm:$0xff]
    %v55 = vld [vmem:[%s2 + $0x98] sm:$0xff]
    %v56 = vld [vmem:[%s2 + $0xa0] sm:$0xff]
    %v57 = vld [vmem:[%s2 + $0xa8] sm:$0xff]
    %v58 = vld [vmem:[%s2 + $0xb0] sm:$0xff]
    %v59 = vld [vmem:[%s2 + $0xb8] sm:$0xff]
    %v60 = vld [vmem:[%s2 + $0xc0] sm:$0xff]
    %v61 = vld [vmem:[%s2 + $0xc8] sm:$0xff]
    %v62 = vld [vmem:[%s2 + $0xd0] sm:$0xff]
    %v63 = vld [vmem:[%s2 + $0xd8] sm:$0xff]
    %v64 = vld [vmem:[%s2 + $0xe0] sm:$0xff]
    %v65 = vld [vmem:[%s2 + $0xe8] sm:$0xff]
    %v66 = vld [vmem:[%s2 + $0xf0] sm:$0xff]
    %v67 = vld [vmem:[%s2 + $0xf8] sm:$0xff]
    %v68 = vld [vmem:[%s2 + $0x100] sm:$0xff]
    %v69 = vld [vmem:[%s2 + $0x108] sm:$0xff]
    %v70 = vld [vmem:[%s2 + $0x110] sm:$0xff]
    %v71 = vld [vmem:[%s2 + $0x118] sm:$0xff]
    %v72 = vld [vmem:[%s2 + $0x120] sm:$0xff]
    %v73 = vld [vmem:[%s2 + $0x128] sm:$0xff]
    %v74 = vld [vmem:[%s2 + $0x130] sm:$0xff]
    %v75 = vld [vmem:[%s2 + $0x138] sm:$0xff]
    %v76 = vld [vmem:[%s2 + $0x140] sm:$0xff]
    %v77 = vld [vmem:[%s2 + $0x148] sm:$0xff]
    %v78 = vld [vmem:[%s2 + $0x150] sm:$0xff]
    %v79 = vld [vmem:[%s2 + $0x158] sm:$0xff]
    %v80 = vld [vmem:[%s2 + $0x160] sm:$0xff]
    %v81 = vld [vmem:[%s2 + $0x168] sm:$0xff]
    %v82 = vld [vmem:[%s2 + $0x170] sm:$0xff]
    %v83 = vld [vmem:[%s2 + $0x178] sm:$0xff]
    %v84 = vld [vmem:[%s2 + $0x180] sm:$0xff]
    %v85 = vld [vmem:[%s2 + $0x188] sm:$0xff]
    %v86 = vld [vmem:[%s2 + $0x190] sm:$0xff]
    %v87 = vld [vmem:[%s2 + $0x198] sm:$0xff]
    %v88 = vld [vmem:[%s2 + $0x1a0] sm:$0xff]
    %v89 = vld [vmem:[%s2 + $0x1a8] sm:$0xff]
    %v90 = vld [vmem:[%s2 + $0x1b0] sm:$0xff]
    %v91 = vld [vmem:[%s2 + $0x1b8] sm:$0xff]
    %v92 = vld [vmem:[%s2 + $0x1c0] sm:$0xff]
    %v93 = vld [vmem:[%s2 + $0x1c8] sm:$0xff]
    %v94 = vld [vmem:[%s2 + $0x1d0] sm:$0xff]
    %v95 = vld [vmem:[%s2 + $0x1d8] sm:$0xff]
    %v96 = vld [vmem:[%s2 + $0x1e0] sm:$0xff]
    %v97 = vld [vmem:[%s2 + $0x1e8] sm:$0xff]
    %v98 = vld [vmem:[%s2 + $0x1f0] sm:$0xff]
    %v99 = vld [vmem:[%s2 + $0x1f8] sm:$0xff]
    %v100 = vld [vmem:[%s2 + $0x200] sm:$0xff]
    %v101 = vld [vmem:[%s2 + $0x208] sm:$0xff]
    %v102 = vld [vmem:[%s2 + $0x210] sm:$0xff]
    %v103 = vld [vmem:[%s2 + $0x218] sm:$0xff]
    %v104 = vld [vmem:[%s2 + $0x220] sm:$0xff]
    %v105 = vld [vmem:[%s2 + $0x228] sm:$0xff]
    %v106 = vld [vmem:[%s2 + $0x230] sm:$0xff]
    %v107 = vld [vmem:[%s2 + $0x238] sm:$0xff]
    %v108 = vld [vmem:[%s2 + $0x240] sm:$0xff]
    %v109 = vld [vmem:[%s2 + $0x248] sm:$0xff]
    %v110 = vld [vmem:[%s2 + $0x250] sm:$0xff]
    %v111 = vld [vmem:[%s2 + $0x258] sm:$0xff]
    %v112 = vld [vmem:[%s2 + $0x260] sm:$0xff]
    %v113 = vld [vmem:[%s2 + $0x268] sm:$0xff]
    %v114 = vld [vmem:[%s2 + $0x270] sm:$0xff]
    %v115 = vld [vmem:[%s2 + $0x278] sm:$0xff]
    %v116 = vld [vmem:[%s2 + $0x280] sm:$0xff]
    %v117 = vld [vmem:[%s2 + $0x288] sm:$0xff]
    %v118 = vld [vmem:[%s2 + $0x290] sm:$0xff]
    %v119 = vld [vmem:[%s2 + $0x298] sm:$0xff]
    %v120 = vld [vmem:[%s2 + $0x2a0] sm:$0xff]
    %v121 = vld [vmem:[%s2 + $0x2a8] sm:$0xff]
    %v122 = vld [vmem:[%s2 + $0x2b0] sm:$0xff]
    %v123 = vld [vmem:[%s2 + $0x2b8] sm:$0xff]
    %v124 = vld [vmem:[%s2 + $0x2c0] sm:$0xff]
    %v125 = vld [vmem:[%s2 + $0x2c8] sm:$0xff]
    %v126 = vld [vmem:[%s2 + $0x2d0] sm:$0xff]
    %v127 = vld [vmem:[%s2 + $0x2d8] sm:$0xff]
    %v128 = vld [vmem:[%s2 + $0x2e0] sm:$0xff]
    %v129 = vld [vmem:[%s2 + $0x2e8] sm:$0xff]
    %v130 = vld [vmem:[%s2 + $0x2f0] sm:$0xff]
    %v131 = vld [vmem:[%s2 + $0x2f8] sm:$0xff]
    %v132 = vld [vmem:[%s2 + $0x300] sm:$0xff]
    %v133 = vld [vmem:[%s2 + $0x308] sm:$0xff]
    %v134 = vld [vmem:[%s2 + $0x310] sm:$0xff]
    %v135 = vld [vmem:[%s2 + $0x318] sm:$0xff]
    %v136 = vld [vmem:[%s2 + $0x320] sm:$0xff]
    %v137 = vld [vmem:[%s2 + $0x328] sm:$0xff]
    %v138 = vld [vmem:[%s2 + $0x330] sm:$0xff]
    %v139 = vld [vmem:[%s2 + $0x338] sm:$0xff]
    %v140 = vld [vmem:[%s2 + $0x340] sm:$0xff]
    %v141 = vld [vmem:[%s2 + $0x348] sm:$0xff]
    %v142 = vld [vmem:[%s2 + $0x350] sm:$0xff]
    %v143 = vld [vmem:[%s2 + $0x358] sm:$0xff]
    %v144 = vld [vmem:[%s2 + $0x360] sm:$0xff]
    %v145 = vld [vmem:[%s2 + $0x368] sm:$0xff]
    %v146 = vld [vmem:[%s2 + $0x370] sm:$0xff]
    %v147 = vld [vmem:[%s2 + $0x378] sm:$0xff]
    %v148 = vld [vmem:[%s2 + $0x380] sm:$0xff]
    %v149 = vld [vmem:[%s2 + $0x388] sm:$0xff]
    %v150 = vld [vmem:[%s2 + $0x390] sm:$0xff]
    %v151 = vld [vmem:[%s2 + $0x398] sm:$0xff]
    %v152 = vld [vmem:[%s2 + $0x3a0] sm:$0xff]
    %v153 = vld [vmem:[%s2 + $0x3a8] sm:$0xff]
    %v154 = vld [vmem:[%s2 + $0x3b0] sm:$0xff]
    %v155 = vld [vmem:[%s2 + $0x3b8] sm:$0xff]
    %v156 = vld [vmem:[%s2 + $0x3c0] sm:$0xff]
    %v157 = vld [vmem:[%s2 + $0x3c8] sm:$0xff]
    %v158 = vld [vmem:[%s2 + $0x3d0] sm:$0xff]
    %v159 = vld [vmem:[%s2 + $0x3d8] sm:$0xff]
    %v160 = vld [vmem:[%s2 + $0x3e0] sm:$0xff]
    %v161 = vld [vmem:[%s2 + $0x3e8] sm:$0xff]
    %v162 = vld [vmem:[%s2 + $0x3f0] sm:$0xff]
    %v163 = vld [vmem:[%s2 + $0x3f8] sm:$0xff]
    %v164 = vld [vmem:[%s2 + $0x400] sm:$0xff]
    %v165 = vld [vmem:[%s2 + $0x408] sm:$0xff]
    %v166 = vld [vmem:[%s2 + $0x410] sm:$0xff]
    %v167 = vld [vmem:[%s2 + $0x418] sm:$0xff]
    %v168 = vld [vmem:[%s2 + $0x420] sm:$0xff]
    %v169 = vld [vmem:[%s2 + $0x428] sm:$0xff]
    %v170 = vld [vmem:[%s2 + $0x430] sm:$0xff]
    %v171 = vld [vmem:[%s2 + $0x438] sm:$0xff]
    %v172 = vld [vmem:[%s2 + $0x440] sm:$0xff]
    %v173 = vld [vmem:[%s2 + $0x448] sm:$0xff]
    %v174 = vld [vmem:[%s2 + $0x450] sm:$0xff]
    %v175 = vld [vmem:[%s2 + $0x458] sm:$0xff]
    %v176 = vld [vmem:[%s2 + $0x460] sm:$0xff]
    %v177 = vld [vmem:[%s2 + $0x468] sm:$0xff]
    %v178 = vld [vmem:[%s2 + $0x470] sm:$0xff]
    %v179 = vld [vmem:[%s2 + $0x478] sm:$0xff]
    %v180 = vld [vmem:[%s2 + $0x480] sm:$0xff]
    %v181 = vld [vmem:[%s2 + $0x488] sm:$0xff]
    %v182 = vld [vmem:[%s2 + $0x490] sm:$0xff]
    %v183 = vld [vmem:[%s2 + $0x498] sm:$0xff]
    %v184 = vld [vmem:[%s2 + $0x4a0] sm:$0xff]
    %v185 = vld [vmem:[%s2 + $0x4a8] sm:$0xff]
    %v186 = vld [vmem:[%s2 + $0x4b0] sm:$0xff]
    %v187 = vld [vmem:[%s2 + $0x4b8] sm:$0xff]
    %v188 = vld [vmem:[%s2 + $0x4c0] sm:$0xff]
    %v189 = vld [vmem:[%s2 + $0x4c8] sm:$0xff]
    %v190 = vld [vmem:[%s2 + $0x4d0] sm:$0xff]
    %v191 = vld [vmem:[%s2 + $0x4d8] sm:$0xff]
    %v192 = vld [vmem:[%s2 + $0x4e0] sm:$0xff]
    %v193 = vld [vmem:[%s2 + $0x4e8] sm:$0xff]
    %v194 = vld [vmem:[%s2 + $0x4f0] sm:$0xff]
    %v195 = vld [vmem:[%s2 + $0x4f8] sm:$0xff]
    %v196 = vld [vmem:[%s2 + $0x500] sm:$0xff]
    %v197 = vld [vmem:[%s2 + $0x508] sm:$0xff]
    %v198 = vld [vmem:[%s2 + $0x510] sm:$0xff]
    %v199 = vld [vmem:[%s2 + $0x518] sm:$0xff]
    %v200 = vld [vmem:[%s2 + $0x520] sm:$0xff]
    %v201 = vld [vmem:[%s2 + $0x528] sm:$0xff]
    %v202 = vld [vmem:[%s2 + $0x530] sm:$0xff]
    %v203 = vld [vmem:[%s2 + $0x538] sm:$0xff]
    %v204 = vld [vmem:[%s2 + $0x540] sm:$0xff]
    %v205 = vld [vmem:[%s2 + $0x548] sm:$0xff]
    %v206 = vld [vmem:[%s2 + $0x550] sm:$0xff]
    %v207 = vld [vmem:[%s2 + $0x558] sm:$0xff]
    %v208 = vld [vmem:[%s2 + $0x560] sm:$0xff]
    %v209 = vld [vmem:[%s2 + $0x568] sm:$0xff]
    %v210 = vld [vmem:[%s2 + $0x570] sm:$0xff]
    %v211 = vld [vmem:[%s2 + $0x578] sm:$0xff]
    %v212 = vld [vmem:[%s2 + $0x580] sm:$0xff]
    %v213 = vld [vmem:[%s2 + $0x588] sm:$0xff]
    %v214 = vld [vmem:[%s2 + $0x590] sm:$0xff]
    %v215 = vld [vmem:[%s2 + $0x598] sm:$0xff]
    %v216 = vld [vmem:[%s2 + $0x5a0] sm:$0xff]
    %v217 = vld [vmem:[%s2 + $0x5a8] sm:$0xff]
    %v218 = vld [vmem:[%s2 + $0x5b0] sm:$0xff]
    %v219 = vld [vmem:[%s2 + $0x5b8] sm:$0xff]
    %v220 = vld [vmem:[%s2 + $0x5c0] sm:$0xff]
    %v221 = vld [vmem:[%s2 + $0x5c8] sm:$0xff]
    %v222 = vld [vmem:[%s2 + $0x5d0] sm:$0xff]
    %v223 = vld [vmem:[%s2 + $0x5d8] sm:$0xff]
    %v224 = vld [vmem:[%s2 + $0x5e0] sm:$0xff]
    %v225 = vld [vmem:[%s2 + $0x5e8] sm:$0xff]
    %v226 = vld [vmem:[%s2 + $0x5f0] sm:$0xff]
    %v227 = vld [vmem:[%s2 + $0x5f8] sm:$0xff]
    %v228 = vld [vmem:[%s2 + $0x600] sm:$0xff]
    %v229 = vld [vmem:[%s2 + $0x608] sm:$0xff]
    %v230 = vld [vmem:[%s2 + $0x610] sm:$0xff]
    %v231 = vld [vmem:[%s2 + $0x618] sm:$0xff]
    %v232 = vld [vmem:[%s2 + $0x620] sm:$0xff]
    %v233 = vld [vmem:[%s2 + $0x628] sm:$0xff]
    %v234 = vld [vmem:[%s2 + $0x630] sm:$0xff]
    %v235 = vld [vmem:[%s2 + $0x638] sm:$0xff]
    %v236 = vld [vmem:[%s2 + $0x640] sm:$0xff]
    %v237 = vld [vmem:[%s2 + $0x648] sm:$0xff]
    %v238 = vld [vmem:[%s2 + $0x650] sm:$0xff]
    %v239 = vld [vmem:[%s2 + $0x658] sm:$0xff]
    %v240 = vld [vmem:[%s2 + $0x660] sm:$0xff]
    %v241 = vld [vmem:[%s2 + $0x668] sm:$0xff]
    %v242 = vld [vmem:[%s2 + $0x670] sm:$0xff]
    %v243 = vld [vmem:[%s2 + $0x678] sm:$0xff]
    %v244 = vld [vmem:[%s2 + $0x680] sm:$0xff]
    %v245 = vld [vmem:[%s2 + $0x688] sm:$0xff]
    %v246 = vld [vmem:[%s2 + $0x690] sm:$0xff]
    %v247 = vld [vmem:[%s2 + $0x698] sm:$0xff]
    %v248 = vld [vmem:[%s2 + $0x6a0] sm:$0xff]
    %v249 = vld [vmem:[%s2 + $0x6a8] sm:$0xff]
    %v250 = vld [vmem:[%s2 + $0x6b0] sm:$0xff]
    %v251 = vld [vmem:[%s2 + $0x6b8] sm:$0xff]
    %v252 = vld [vmem:[%s2 + $0x6c0] sm:$0xff]
    %v253 = vld [vmem:[%s2 + $0x6c8] sm:$0xff]
    %v254 = vld [vmem:[%s2 + $0x6d0] sm:$0xff]
    %v255 = vld [vmem:[%s2 + $0x6d8] sm:$0xff]
    %v256 = vld [vmem:[%s2 + $0x6e0] sm:$0xff]
    %v257 = vld [vmem:[%s2 + $0x6e8] sm:$0xff]
    %v258 = vld [vmem:[%s2 + $0x6f0] sm:$0xff]
    %v259 = vld [vmem:[%s2 + $0x6f8] sm:$0xff]
    %v260 = vld [vmem:[%s2 + $0x700] sm:$0xff]
    %v261 = vld [vmem:[%s2 + $0x708] sm:$0xff]
    %v262 = vld [vmem:[%s2 + $0x710] sm:$0xff]
    %v263 = vld [vmem:[%s2 + $0x718] sm:$0xff]
    %v264 = vld [vmem:[%s2 + $0x720] sm:$0xff]
    %v265 = vld [vmem:[%s2 + $0x728] sm:$0xff]
    %v266 = vld [vmem:[%s2 + $0x730] sm:$0xff]
    %v267 = vld [vmem:[%s2 + $0x738] sm:$0xff]
    %v268 = vld [vmem:[%s2 + $0x740] sm:$0xff]
    %v269 = vld [vmem:[%s2 + $0x748] sm:$0xff]
    %v270 = vld [vmem:[%s2 + $0x750] sm:$0xff]
    %v271 = vld [vmem:[%s2 + $0x758] sm:$0xff]
    %v272 = vld [vmem:[%s2 + $0x760] sm:$0xff]
    %v273 = vld [vmem:[%s2 + $0x768] sm:$0xff]
    %v274 = vld [vmem:[%s2 + $0x770] sm:$0xff]
    %v275 = vld [vmem:[%s2 + $0x778] sm:$0xff]
    %v276 = vld [vmem:[%s2 + $0x780] sm:$0xff]
    %v277 = vld [vmem:[%s2 + $0x788] sm:$0xff]
    %v278 = vld [vmem:[%s2 + $0x790] sm:$0xff]
    %v279 = vld [vmem:[%s2 + $0x798] sm:$0xff]
    %v280 = vld [vmem:[%s2 + $0x7a0] sm:$0xff]
    %v281 = vld [vmem:[%s2 + $0x7a8] sm:$0xff]
    %v282 = vld [vmem:[%s2 + $0x7b0] sm:$0xff]
    %v283 = vld [vmem:[%s2 + $0x7b8] sm:$0xff]
    %v284 = vld [vmem:[%s2 + $0x7c0] sm:$0xff]
    %v285 = vld [vmem:[%s2 + $0x7c8] sm:$0xff]
    %v286 = vld [vmem:[%s2 + $0x7d0] sm:$0xff]
    %v287 = vld [vmem:[%s2 + $0x7d8] sm:$0xff]
    %v288 = vld [vmem:[%s2 + $0x7e0] sm:$0xff]
    %v289 = vld [vmem:[%s2 + $0x7e8] sm:$0xff]
    %v290 = vld [vmem:[%s2 + $0x7f0] sm:$0xff]
    %v291 = vld [vmem:[%s2 + $0x7f8] sm:$0xff]
    %v292 = vld [vmem:[%s2 + $0x800] sm:$0xff]
    %v293 = vld [vmem:[%s2 + $0x808] sm:$0xff]
    %v294 = vld [vmem:[%s2 + $0x810] sm:$0xff]
    %v295 = vld [vmem:[%s2 + $0x818] sm:$0xff]
    %v296 = vld [vmem:[%s2 + $0x820] sm:$0xff]
    %v297 = vld [vmem:[%s2 + $0x828] sm:$0xff]
    %v298 = vld [vmem:[%s2 + $0x830] sm:$0xff]
    %v299 = vld [vmem:[%s2 + $0x838] sm:$0xff]
    %v300 = vld [vmem:[%s2 + $0x840] sm:$0xff]
    %v301 = vld [vmem:[%s2 + $0x848] sm:$0xff]
    %v302 = vld [vmem:[%s2 + $0x850] sm:$0xff]
    %v303 = vld [vmem:[%s2 + $0x858] sm:$0xff]
    %v304 = vld [vmem:[%s2 + $0x860] sm:$0xff]
    %v305 = vld [vmem:[%s2 + $0x868] sm:$0xff]
    %v306 = vld [vmem:[%s2 + $0x870] sm:$0xff]
    %v307 = vld [vmem:[%s2 + $0x878] sm:$0xff]
    %v308 = vld [vmem:[%s2 + $0x880] sm:$0xff]
    %v309 = vld [vmem:[%s2 + $0x888] sm:$0xff]
    %v310 = vld [vmem:[%s2 + $0x890] sm:$0xff]
    %v311 = vld [vmem:[%s2 + $0x898] sm:$0xff]
    %v312 = vld [vmem:[%s2 + $0x8a0] sm:$0xff]
    %v313 = vld [vmem:[%s2 + $0x8a8] sm:$0xff]
    %v314 = vld [vmem:[%s2 + $0x8b0] sm:$0xff]
    %v315 = vld [vmem:[%s2 + $0x8b8] sm:$0xff]
    %v316 = vld [vmem:[%s2 + $0x8c0] sm:$0xff]
    %v317 = vld [vmem:[%s2 + $0x8c8] sm:$0xff]
    %v318 = vld [vmem:[%s2 + $0x8d0] sm:$0xff]
    %v319 = vld [vmem:[%s2 + $0x8d8] sm:$0xff]
    %v320 = vld [vmem:[%s2 + $0x8e0] sm:$0xff]
    %v321 = vld [vmem:[%s2 + $0x8e8] sm:$0xff]
    %v322 = vld [vmem:[%s2 + $0x8f0] sm:$0xff]
    %v323 = vld [vmem:[%s2 + $0x8f8] sm:$0xff]
    %v324 = vld [vmem:[%s3] ss:$4 sm:$0x3f]
    %s325 = scalar_lea.vmem %s3, 1
    %v326 = vld [vmem:[%s325] ss:$4 sm:$0x3f]
    %s327 = scalar_lea.vmem %s3, 2
    %v328 = vld [vmem:[%s327] ss:$4 sm:$0x3f]
    %v329 = vld [vmem:[%s1] sm:$0xff]
    %v330 = vld [vmem:[%s1 + $0x8] sm:$0xff]
    %v331 = vld [vmem:[%s1 + $0x10] sm:$0xff]
    %v332 = vld [vmem:[%s1 + $0x18] sm:$0xff]
    %v333 = vld [vmem:[%s1 + $0x20] sm:$0xff]
    %v334 = vld [vmem:[%s1 + $0x28] sm:$0xff]
    %v335 = vld [vmem:[%s1 + $0x30] sm:$0xff]
    %v336 = vld [vmem:[%s1 + $0x38] sm:$0xff]
    %v337 = vld [vmem:[%s1 + $0x40] sm:$0xff]
    %v338 = vld [vmem:[%s1 + $0x48] sm:$0xff]
    %v339 = vld [vmem:[%s1 + $0x50] sm:$0xff]
    %v340 = vld [vmem:[%s1 + $0x58] sm:$0xff]
    %v342 = vperm.slane %v324, 0
    %v343 = vperm.slane %v324, 1
    %v344 = vperm.slane %v324, 2
    %v345 = vperm.slane %v324, 3
    %v346 = vperm.slane %v324, 4
    %v347 = vperm.slane %v324, 5
    %v354 = vadd.f32 %v329, %v342
    %v355 = vadd.f32 %v330, %v343
    %v356 = vadd.f32 %v331, %v344
    %v357 = vadd.f32 %v332, %v345
    %v358 = vadd.f32 %v333, %v346
    %v359 = vadd.f32 %v334, %v347
    %v360 = vadd.f32 %v335, %v342
    %v361 = vadd.f32 %v336, %v343
    %v362 = vadd.f32 %v337, %v344
    %v363 = vadd.f32 %v338, %v345
    %v364 = vadd.f32 %v339, %v346
    %v365 = vadd.f32 %v340, %v347
    %v654 = vunpack.c.l.b16 %v36
    %v655 = vunpack.c.h.b16 %v36
    %v656 = vunpack.c.l.b16 %v37
    %v657 = vunpack.c.h.b16 %v37
    %v658 = vunpack.c.l.b16 %v38
    %v659 = vunpack.c.h.b16 %v38
    %v660 = vunpack.c.l.b16 %v39
    %v661 = vunpack.c.h.b16 %v39
    %v662 = vunpack.c.l.b16 %v40
    %v663 = vunpack.c.h.b16 %v40
    %v664 = vunpack.c.l.b16 %v41
    %v665 = vunpack.c.h.b16 %v41
    %v666 = vunpack.c.l.b16 %v42
    %v667 = vunpack.c.h.b16 %v42
    %v668 = vunpack.c.l.b16 %v43
    %v669 = vunpack.c.h.b16 %v43
    %v670 = vunpack.c.l.b16 %v44
    %v671 = vunpack.c.h.b16 %v44
    %v672 = vunpack.c.l.b16 %v45
    %v673 = vunpack.c.h.b16 %v45
    %v674 = vunpack.c.l.b16 %v46
    %v675 = vunpack.c.h.b16 %v46
    %v676 = vunpack.c.l.b16 %v47
    %v677 = vunpack.c.h.b16 %v47
    %v678 = vunpack.c.l.b16 %v48
    %v679 = vunpack.c.h.b16 %v48
    %v680 = vunpack.c.l.b16 %v49
    %v681 = vunpack.c.h.b16 %v49
    %v682 = vunpack.c.l.b16 %v50
    %v683 = vunpack.c.h.b16 %v50
    %v684 = vunpack.c.l.b16 %v51
    %v685 = vunpack.c.h.b16 %v51
    %v686 = vunpack.c.l.b16 %v52
    %v687 = vunpack.c.h.b16 %v52
    %v688 = vunpack.c.l.b16 %v53
    %v689 = vunpack.c.h.b16 %v53
    %v690 = vunpack.c.l.b16 %v54
    %v691 = vunpack.c.h.b16 %v54
    %v692 = vunpack.c.l.b16 %v55
    %v693 = vunpack.c.h.b16 %v55
    %v694 = vunpack.c.l.b16 %v56
    %v695 = vunpack.c.h.b16 %v56
    %v696 = vunpack.c.l.b16 %v57
    %v697 = vunpack.c.h.b16 %v57
    %v698 = vunpack.c.l.b16 %v58
    %v699 = vunpack.c.h.b16 %v58
    %v700 = vunpack.c.l.b16 %v59
    %v701 = vunpack.c.h.b16 %v59
    %v702 = vunpack.c.l.b16 %v60
    %v703 = vunpack.c.h.b16 %v60
    %v704 = vunpack.c.l.b16 %v61
    %v705 = vunpack.c.h.b16 %v61
    %v706 = vunpack.c.l.b16 %v62
    %v707 = vunpack.c.h.b16 %v62
    %v708 = vunpack.c.l.b16 %v63
    %v709 = vunpack.c.h.b16 %v63
    %v710 = vunpack.c.l.b16 %v64
    %v711 = vunpack.c.h.b16 %v64
    %v712 = vunpack.c.l.b16 %v65
    %v713 = vunpack.c.h.b16 %v65
    %v714 = vunpack.c.l.b16 %v66
    %v715 = vunpack.c.h.b16 %v66
    %v716 = vunpack.c.l.b16 %v67
    %v717 = vunpack.c.h.b16 %v67
    %v718 = vunpack.c.l.b16 %v68
    %v719 = vunpack.c.h.b16 %v68
    %v720 = vunpack.c.l.b16 %v69
    %v721 = vunpack.c.h.b16 %v69
    %v722 = vunpack.c.l.b16 %v70
    %v723 = vunpack.c.h.b16 %v70
    %v724 = vunpack.c.l.b16 %v71
    %v725 = vunpack.c.h.b16 %v71
    %v726 = vunpack.c.l.b16 %v72
    %v727 = vunpack.c.h.b16 %v72
    %v728 = vunpack.c.l.b16 %v73
    %v729 = vunpack.c.h.b16 %v73
    %v730 = vunpack.c.l.b16 %v74
    %v731 = vunpack.c.h.b16 %v74
    %v732 = vunpack.c.l.b16 %v75
    %v733 = vunpack.c.h.b16 %v75
    %v734 = vunpack.c.l.b16 %v76
    %v735 = vunpack.c.h.b16 %v76
    %v736 = vunpack.c.l.b16 %v77
    %v737 = vunpack.c.h.b16 %v77
    %v738 = vunpack.c.l.b16 %v78
    %v739 = vunpack.c.h.b16 %v78
    %v740 = vunpack.c.l.b16 %v79
    %v741 = vunpack.c.h.b16 %v79
    %v742 = vunpack.c.l.b16 %v80
    %v743 = vunpack.c.h.b16 %v80
    %v744 = vunpack.c.l.b16 %v81
    %v745 = vunpack.c.h.b16 %v81
    %v746 = vunpack.c.l.b16 %v82
    %v747 = vunpack.c.h.b16 %v82
    %v748 = vunpack.c.l.b16 %v83
    %v749 = vunpack.c.h.b16 %v83
    %v750 = vunpack.c.l.b16 %v84
    %v751 = vunpack.c.h.b16 %v84
    %v752 = vunpack.c.l.b16 %v85
    %v753 = vunpack.c.h.b16 %v85
    %v754 = vunpack.c.l.b16 %v86
    %v755 = vunpack.c.h.b16 %v86
    %v756 = vunpack.c.l.b16 %v87
    %v757 = vunpack.c.h.b16 %v87
    %v758 = vunpack.c.l.b16 %v88
    %v759 = vunpack.c.h.b16 %v88
    %v760 = vunpack.c.l.b16 %v89
    %v761 = vunpack.c.h.b16 %v89
    %v762 = vunpack.c.l.b16 %v90
    %v763 = vunpack.c.h.b16 %v90
    %v764 = vunpack.c.l.b16 %v91
    %v765 = vunpack.c.h.b16 %v91
    %v766 = vunpack.c.l.b16 %v92
    %v767 = vunpack.c.h.b16 %v92
    %v768 = vunpack.c.l.b16 %v93
    %v769 = vunpack.c.h.b16 %v93
    %v770 = vunpack.c.l.b16 %v94
    %v771 = vunpack.c.h.b16 %v94
    %v772 = vunpack.c.l.b16 %v95
    %v773 = vunpack.c.h.b16 %v95
    %v774 = vunpack.c.l.b16 %v96
    %v775 = vunpack.c.h.b16 %v96
    %v776 = vunpack.c.l.b16 %v97
    %v777 = vunpack.c.h.b16 %v97
    %v778 = vunpack.c.l.b16 %v98
    %v779 = vunpack.c.h.b16 %v98
    %v780 = vunpack.c.l.b16 %v99
    %v781 = vunpack.c.h.b16 %v99
    %v782 = vunpack.c.l.b16 %v100
    %v783 = vunpack.c.h.b16 %v100
    %v784 = vunpack.c.l.b16 %v101
    %v785 = vunpack.c.h.b16 %v101
    %v786 = vunpack.c.l.b16 %v102
    %v787 = vunpack.c.h.b16 %v102
    %v788 = vunpack.c.l.b16 %v103
    %v789 = vunpack.c.h.b16 %v103
    %v790 = vunpack.c.l.b16 %v104
    %v791 = vunpack.c.h.b16 %v104
    %v792 = vunpack.c.l.b16 %v105
    %v793 = vunpack.c.h.b16 %v105
    %v794 = vunpack.c.l.b16 %v106
    %v795 = vunpack.c.h.b16 %v106
    %v796 = vunpack.c.l.b16 %v107
    %v797 = vunpack.c.h.b16 %v107
    %v798 = vunpack.c.l.b16 %v108
    %v799 = vunpack.c.h.b16 %v108
    %v800 = vunpack.c.l.b16 %v109
    %v801 = vunpack.c.h.b16 %v109
    %v802 = vunpack.c.l.b16 %v110
    %v803 = vunpack.c.h.b16 %v110
    %v804 = vunpack.c.l.b16 %v111
    %v805 = vunpack.c.h.b16 %v111
    %v806 = vunpack.c.l.b16 %v112
    %v807 = vunpack.c.h.b16 %v112
    %v808 = vunpack.c.l.b16 %v113
    %v809 = vunpack.c.h.b16 %v113
    %v810 = vunpack.c.l.b16 %v114
    %v811 = vunpack.c.h.b16 %v114
    %v812 = vunpack.c.l.b16 %v115
    %v813 = vunpack.c.h.b16 %v115
    %v814 = vunpack.c.l.b16 %v116
    %v815 = vunpack.c.h.b16 %v116
    %v816 = vunpack.c.l.b16 %v117
    %v817 = vunpack.c.h.b16 %v117
    %v818 = vunpack.c.l.b16 %v118
    %v819 = vunpack.c.h.b16 %v118
    %v820 = vunpack.c.l.b16 %v119
    %v821 = vunpack.c.h.b16 %v119
    %v822 = vunpack.c.l.b16 %v120
    %v823 = vunpack.c.h.b16 %v120
    %v824 = vunpack.c.l.b16 %v121
    %v825 = vunpack.c.h.b16 %v121
    %v826 = vunpack.c.l.b16 %v122
    %v827 = vunpack.c.h.b16 %v122
    %v828 = vunpack.c.l.b16 %v123
    %v829 = vunpack.c.h.b16 %v123
    %v830 = vunpack.c.l.b16 %v124
    %v831 = vunpack.c.h.b16 %v124
    %v832 = vunpack.c.l.b16 %v125
    %v833 = vunpack.c.h.b16 %v125
    %v834 = vunpack.c.l.b16 %v126
    %v835 = vunpack.c.h.b16 %v126
    %v836 = vunpack.c.l.b16 %v127
    %v837 = vunpack.c.h.b16 %v127
    %v838 = vunpack.c.l.b16 %v128
    %v839 = vunpack.c.h.b16 %v128
    %v840 = vunpack.c.l.b16 %v129
    %v841 = vunpack.c.h.b16 %v129
    %v842 = vunpack.c.l.b16 %v130
    %v843 = vunpack.c.h.b16 %v130
    %v844 = vunpack.c.l.b16 %v131
    %v845 = vunpack.c.h.b16 %v131
    %v846 = vunpack.c.l.b16 %v132
    %v847 = vunpack.c.h.b16 %v132
    %v848 = vunpack.c.l.b16 %v133
    %v849 = vunpack.c.h.b16 %v133
    %v850 = vunpack.c.l.b16 %v134
    %v851 = vunpack.c.h.b16 %v134
    %v852 = vunpack.c.l.b16 %v135
    %v853 = vunpack.c.h.b16 %v135
    %v854 = vunpack.c.l.b16 %v136
    %v855 = vunpack.c.h.b16 %v136
    %v856 = vunpack.c.l.b16 %v137
    %v857 = vunpack.c.h.b16 %v137
    %v858 = vunpack.c.l.b16 %v138
    %v859 = vunpack.c.h.b16 %v138
    %v860 = vunpack.c.l.b16 %v139
    %v861 = vunpack.c.h.b16 %v139
    %v862 = vunpack.c.l.b16 %v140
    %v863 = vunpack.c.h.b16 %v140
    %v864 = vunpack.c.l.b16 %v141
    %v865 = vunpack.c.h.b16 %v141
    %v866 = vunpack.c.l.b16 %v142
    %v867 = vunpack.c.h.b16 %v142
    %v868 = vunpack.c.l.b16 %v143
    %v869 = vunpack.c.h.b16 %v143
    %v870 = vunpack.c.l.b16 %v144
    %v871 = vunpack.c.h.b16 %v144
    %v872 = vunpack.c.l.b16 %v145
    %v873 = vunpack.c.h.b16 %v145
    %v874 = vunpack.c.l.b16 %v146
    %v875 = vunpack.c.h.b16 %v146
    %v876 = vunpack.c.l.b16 %v147
    %v877 = vunpack.c.h.b16 %v147
    %v878 = vunpack.c.l.b16 %v148
    %v879 = vunpack.c.h.b16 %v148
    %v880 = vunpack.c.l.b16 %v149
    %v881 = vunpack.c.h.b16 %v149
    %v882 = vunpack.c.l.b16 %v150
    %v883 = vunpack.c.h.b16 %v150
    %v884 = vunpack.c.l.b16 %v151
    %v885 = vunpack.c.h.b16 %v151
    %v886 = vunpack.c.l.b16 %v152
    %v887 = vunpack.c.h.b16 %v152
    %v888 = vunpack.c.l.b16 %v153
    %v889 = vunpack.c.h.b16 %v153
    %v890 = vunpack.c.l.b16 %v154
    %v891 = vunpack.c.h.b16 %v154
    %v892 = vunpack.c.l.b16 %v155
    %v893 = vunpack.c.h.b16 %v155
    %v894 = vunpack.c.l.b16 %v156
    %v895 = vunpack.c.h.b16 %v156
    %v896 = vunpack.c.l.b16 %v157
    %v897 = vunpack.c.h.b16 %v157
    %v898 = vunpack.c.l.b16 %v158
    %v899 = vunpack.c.h.b16 %v158
    %v900 = vunpack.c.l.b16 %v159
    %v901 = vunpack.c.h.b16 %v159
    %v902 = vunpack.c.l.b16 %v160
    %v903 = vunpack.c.h.b16 %v160
    %v904 = vunpack.c.l.b16 %v161
    %v905 = vunpack.c.h.b16 %v161
    %v906 = vunpack.c.l.b16 %v162
    %v907 = vunpack.c.h.b16 %v162
    %v908 = vunpack.c.l.b16 %v163
    %v909 = vunpack.c.h.b16 %v163
    %v910 = vunpack.c.l.b16 %v164
    %v911 = vunpack.c.h.b16 %v164
    %v912 = vunpack.c.l.b16 %v165
    %v913 = vunpack.c.h.b16 %v165
    %v914 = vunpack.c.l.b16 %v166
    %v915 = vunpack.c.h.b16 %v166
    %v916 = vunpack.c.l.b16 %v167
    %v917 = vunpack.c.h.b16 %v167
    %v918 = vunpack.c.l.b16 %v168
    %v919 = vunpack.c.h.b16 %v168
    %v920 = vunpack.c.l.b16 %v169
    %v921 = vunpack.c.h.b16 %v169
    %v922 = vunpack.c.l.b16 %v170
    %v923 = vunpack.c.h.b16 %v170
    %v924 = vunpack.c.l.b16 %v171
    %v925 = vunpack.c.h.b16 %v171
    %v926 = vunpack.c.l.b16 %v172
    %v927 = vunpack.c.h.b16 %v172
    %v928 = vunpack.c.l.b16 %v173
    %v929 = vunpack.c.h.b16 %v173
    %v930 = vunpack.c.l.b16 %v174
    %v931 = vunpack.c.h.b16 %v174
    %v932 = vunpack.c.l.b16 %v175
    %v933 = vunpack.c.h.b16 %v175
    %v934 = vunpack.c.l.b16 %v176
    %v935 = vunpack.c.h.b16 %v176
    %v936 = vunpack.c.l.b16 %v177
    %v937 = vunpack.c.h.b16 %v177
    %v938 = vunpack.c.l.b16 %v178
    %v939 = vunpack.c.h.b16 %v178
    %v940 = vunpack.c.l.b16 %v179
    %v941 = vunpack.c.h.b16 %v179
    %v942 = vunpack.c.l.b16 %v180
    %v943 = vunpack.c.h.b16 %v180
    %v944 = vunpack.c.l.b16 %v181
    %v945 = vunpack.c.h.b16 %v181
    %v946 = vunpack.c.l.b16 %v182
    %v947 = vunpack.c.h.b16 %v182
    %v948 = vunpack.c.l.b16 %v183
    %v949 = vunpack.c.h.b16 %v183
    %v950 = vunpack.c.l.b16 %v184
    %v951 = vunpack.c.h.b16 %v184
    %v952 = vunpack.c.l.b16 %v185
    %v953 = vunpack.c.h.b16 %v185
    %v954 = vunpack.c.l.b16 %v186
    %v955 = vunpack.c.h.b16 %v186
    %v956 = vunpack.c.l.b16 %v187
    %v957 = vunpack.c.h.b16 %v187
    %v958 = vunpack.c.l.b16 %v188
    %v959 = vunpack.c.h.b16 %v188
    %v960 = vunpack.c.l.b16 %v189
    %v961 = vunpack.c.h.b16 %v189
    %v962 = vunpack.c.l.b16 %v190
    %v963 = vunpack.c.h.b16 %v190
    %v964 = vunpack.c.l.b16 %v191
    %v965 = vunpack.c.h.b16 %v191
    %v966 = vunpack.c.l.b16 %v192
    %v967 = vunpack.c.h.b16 %v192
    %v968 = vunpack.c.l.b16 %v193
    %v969 = vunpack.c.h.b16 %v193
    %v970 = vunpack.c.l.b16 %v194
    %v971 = vunpack.c.h.b16 %v194
    %v972 = vunpack.c.l.b16 %v195
    %v973 = vunpack.c.h.b16 %v195
    %v974 = vunpack.c.l.b16 %v196
    %v975 = vunpack.c.h.b16 %v196
    %v976 = vunpack.c.l.b16 %v197
    %v977 = vunpack.c.h.b16 %v197
    %v978 = vunpack.c.l.b16 %v198
    %v979 = vunpack.c.h.b16 %v198
    %v980 = vunpack.c.l.b16 %v199
    %v981 = vunpack.c.h.b16 %v199
    %v982 = vunpack.c.l.b16 %v200
    %v983 = vunpack.c.h.b16 %v200
    %v984 = vunpack.c.l.b16 %v201
    %v985 = vunpack.c.h.b16 %v201
    %v986 = vunpack.c.l.b16 %v202
    %v987 = vunpack.c.h.b16 %v202
    %v988 = vunpack.c.l.b16 %v203
    %v989 = vunpack.c.h.b16 %v203
    %v990 = vunpack.c.l.b16 %v204
    %v991 = vunpack.c.h.b16 %v204
    %v992 = vunpack.c.l.b16 %v205
    %v993 = vunpack.c.h.b16 %v205
    %v994 = vunpack.c.l.b16 %v206
    %v995 = vunpack.c.h.b16 %v206
    %v996 = vunpack.c.l.b16 %v207
    %v997 = vunpack.c.h.b16 %v207
    %v998 = vunpack.c.l.b16 %v208
    %v999 = vunpack.c.h.b16 %v208
    %v1000 = vunpack.c.l.b16 %v209
    %v1001 = vunpack.c.h.b16 %v209
    %v1002 = vunpack.c.l.b16 %v210
    %v1003 = vunpack.c.h.b16 %v210
    %v1004 = vunpack.c.l.b16 %v211
    %v1005 = vunpack.c.h.b16 %v211
    %v1006 = vunpack.c.l.b16 %v212
    %v1007 = vunpack.c.h.b16 %v212
    %v1008 = vunpack.c.l.b16 %v213
    %v1009 = vunpack.c.h.b16 %v213
    %v1010 = vunpack.c.l.b16 %v214
    %v1011 = vunpack.c.h.b16 %v214
    %v1012 = vunpack.c.l.b16 %v215
    %v1013 = vunpack.c.h.b16 %v215
    %v1014 = vunpack.c.l.b16 %v216
    %v1015 = vunpack.c.h.b16 %v216
    %v1016 = vunpack.c.l.b16 %v217
    %v1017 = vunpack.c.h.b16 %v217
    %v1018 = vunpack.c.l.b16 %v218
    %v1019 = vunpack.c.h.b16 %v218
    %v1020 = vunpack.c.l.b16 %v219
    %v1021 = vunpack.c.h.b16 %v219
    %v1022 = vunpack.c.l.b16 %v220
    %v1023 = vunpack.c.h.b16 %v220
    %v1024 = vunpack.c.l.b16 %v221
    %v1025 = vunpack.c.h.b16 %v221
    %v1026 = vunpack.c.l.b16 %v222
    %v1027 = vunpack.c.h.b16 %v222
    %v1028 = vunpack.c.l.b16 %v223
    %v1029 = vunpack.c.h.b16 %v223
    %v1030 = vunpack.c.l.b16 %v224
    %v1031 = vunpack.c.h.b16 %v224
    %v1032 = vunpack.c.l.b16 %v225
    %v1033 = vunpack.c.h.b16 %v225
    %v1034 = vunpack.c.l.b16 %v226
    %v1035 = vunpack.c.h.b16 %v226
    %v1036 = vunpack.c.l.b16 %v227
    %v1037 = vunpack.c.h.b16 %v227
    %v1038 = vunpack.c.l.b16 %v228
    %v1039 = vunpack.c.h.b16 %v228
    %v1040 = vunpack.c.l.b16 %v229
    %v1041 = vunpack.c.h.b16 %v229
    %v1042 = vunpack.c.l.b16 %v230
    %v1043 = vunpack.c.h.b16 %v230
    %v1044 = vunpack.c.l.b16 %v231
    %v1045 = vunpack.c.h.b16 %v231
    %v1046 = vunpack.c.l.b16 %v232
    %v1047 = vunpack.c.h.b16 %v232
    %v1048 = vunpack.c.l.b16 %v233
    %v1049 = vunpack.c.h.b16 %v233
    %v1050 = vunpack.c.l.b16 %v234
    %v1051 = vunpack.c.h.b16 %v234
    %v1052 = vunpack.c.l.b16 %v235
    %v1053 = vunpack.c.h.b16 %v235
    %v1054 = vunpack.c.l.b16 %v236
    %v1055 = vunpack.c.h.b16 %v236
    %v1056 = vunpack.c.l.b16 %v237
    %v1057 = vunpack.c.h.b16 %v237
    %v1058 = vunpack.c.l.b16 %v238
    %v1059 = vunpack.c.h.b16 %v238
    %v1060 = vunpack.c.l.b16 %v239
    %v1061 = vunpack.c.h.b16 %v239
    %v1062 = vunpack.c.l.b16 %v240
    %v1063 = vunpack.c.h.b16 %v240
    %v1064 = vunpack.c.l.b16 %v241
    %v1065 = vunpack.c.h.b16 %v241
    %v1066 = vunpack.c.l.b16 %v242
    %v1067 = vunpack.c.h.b16 %v242
    %v1068 = vunpack.c.l.b16 %v243
    %v1069 = vunpack.c.h.b16 %v243
    %v1070 = vunpack.c.l.b16 %v244
    %v1071 = vunpack.c.h.b16 %v244
    %v1072 = vunpack.c.l.b16 %v245
    %v1073 = vunpack.c.h.b16 %v245
    %v1074 = vunpack.c.l.b16 %v246
    %v1075 = vunpack.c.h.b16 %v246
    %v1076 = vunpack.c.l.b16 %v247
    %v1077 = vunpack.c.h.b16 %v247
    %v1078 = vunpack.c.l.b16 %v248
    %v1079 = vunpack.c.h.b16 %v248
    %v1080 = vunpack.c.l.b16 %v249
    %v1081 = vunpack.c.h.b16 %v249
    %v1082 = vunpack.c.l.b16 %v250
    %v1083 = vunpack.c.h.b16 %v250
    %v1084 = vunpack.c.l.b16 %v251
    %v1085 = vunpack.c.h.b16 %v251
    %v1086 = vunpack.c.l.b16 %v252
    %v1087 = vunpack.c.h.b16 %v252
    %v1088 = vunpack.c.l.b16 %v253
    %v1089 = vunpack.c.h.b16 %v253
    %v1090 = vunpack.c.l.b16 %v254
    %v1091 = vunpack.c.h.b16 %v254
    %v1092 = vunpack.c.l.b16 %v255
    %v1093 = vunpack.c.h.b16 %v255
    %v1094 = vunpack.c.l.b16 %v256
    %v1095 = vunpack.c.h.b16 %v256
    %v1096 = vunpack.c.l.b16 %v257
    %v1097 = vunpack.c.h.b16 %v257
    %v1098 = vunpack.c.l.b16 %v258
    %v1099 = vunpack.c.h.b16 %v258
    %v1100 = vunpack.c.l.b16 %v259
    %v1101 = vunpack.c.h.b16 %v259
    %v1102 = vunpack.c.l.b16 %v260
    %v1103 = vunpack.c.h.b16 %v260
    %v1104 = vunpack.c.l.b16 %v261
    %v1105 = vunpack.c.h.b16 %v261
    %v1106 = vunpack.c.l.b16 %v262
    %v1107 = vunpack.c.h.b16 %v262
    %v1108 = vunpack.c.l.b16 %v263
    %v1109 = vunpack.c.h.b16 %v263
    %v1110 = vunpack.c.l.b16 %v264
    %v1111 = vunpack.c.h.b16 %v264
    %v1112 = vunpack.c.l.b16 %v265
    %v1113 = vunpack.c.h.b16 %v265
    %v1114 = vunpack.c.l.b16 %v266
    %v1115 = vunpack.c.h.b16 %v266
    %v1116 = vunpack.c.l.b16 %v267
    %v1117 = vunpack.c.h.b16 %v267
    %v1118 = vunpack.c.l.b16 %v268
    %v1119 = vunpack.c.h.b16 %v268
    %v1120 = vunpack.c.l.b16 %v269
    %v1121 = vunpack.c.h.b16 %v269
    %v1122 = vunpack.c.l.b16 %v270
    %v1123 = vunpack.c.h.b16 %v270
    %v1124 = vunpack.c.l.b16 %v271
    %v1125 = vunpack.c.h.b16 %v271
    %v1126 = vunpack.c.l.b16 %v272
    %v1127 = vunpack.c.h.b16 %v272
    %v1128 = vunpack.c.l.b16 %v273
    %v1129 = vunpack.c.h.b16 %v273
    %v1130 = vunpack.c.l.b16 %v274
    %v1131 = vunpack.c.h.b16 %v274
    %v1132 = vunpack.c.l.b16 %v275
    %v1133 = vunpack.c.h.b16 %v275
    %v1134 = vunpack.c.l.b16 %v276
    %v1135 = vunpack.c.h.b16 %v276
    %v1136 = vunpack.c.l.b16 %v277
    %v1137 = vunpack.c.h.b16 %v277
    %v1138 = vunpack.c.l.b16 %v278
    %v1139 = vunpack.c.h.b16 %v278
    %v1140 = vunpack.c.l.b16 %v279
    %v1141 = vunpack.c.h.b16 %v279
    %v1142 = vunpack.c.l.b16 %v280
    %v1143 = vunpack.c.h.b16 %v280
    %v1144 = vunpack.c.l.b16 %v281
    %v1145 = vunpack.c.h.b16 %v281
    %v1146 = vunpack.c.l.b16 %v282
    %v1147 = vunpack.c.h.b16 %v282
    %v1148 = vunpack.c.l.b16 %v283
    %v1149 = vunpack.c.h.b16 %v283
    %v1150 = vunpack.c.l.b16 %v284
    %v1151 = vunpack.c.h.b16 %v284
    %v1152 = vunpack.c.l.b16 %v285
    %v1153 = vunpack.c.h.b16 %v285
    %v1154 = vunpack.c.l.b16 %v286
    %v1155 = vunpack.c.h.b16 %v286
    %v1156 = vunpack.c.l.b16 %v287
    %v1157 = vunpack.c.h.b16 %v287
    %v1158 = vunpack.c.l.b16 %v288
    %v1159 = vunpack.c.h.b16 %v288
    %v1160 = vunpack.c.l.b16 %v289
    %v1161 = vunpack.c.h.b16 %v289
    %v1162 = vunpack.c.l.b16 %v290
    %v1163 = vunpack.c.h.b16 %v290
    %v1164 = vunpack.c.l.b16 %v291
    %v1165 = vunpack.c.h.b16 %v291
    %v1166 = vunpack.c.l.b16 %v292
    %v1167 = vunpack.c.h.b16 %v292
    %v1168 = vunpack.c.l.b16 %v293
    %v1169 = vunpack.c.h.b16 %v293
    %v1170 = vunpack.c.l.b16 %v294
    %v1171 = vunpack.c.h.b16 %v294
    %v1172 = vunpack.c.l.b16 %v295
    %v1173 = vunpack.c.h.b16 %v295
    %v1174 = vunpack.c.l.b16 %v296
    %v1175 = vunpack.c.h.b16 %v296
    %v1176 = vunpack.c.l.b16 %v297
    %v1177 = vunpack.c.h.b16 %v297
    %v1178 = vunpack.c.l.b16 %v298
    %v1179 = vunpack.c.h.b16 %v298
    %v1180 = vunpack.c.l.b16 %v299
    %v1181 = vunpack.c.h.b16 %v299
    %v1182 = vunpack.c.l.b16 %v300
    %v1183 = vunpack.c.h.b16 %v300
    %v1184 = vunpack.c.l.b16 %v301
    %v1185 = vunpack.c.h.b16 %v301
    %v1186 = vunpack.c.l.b16 %v302
    %v1187 = vunpack.c.h.b16 %v302
    %v1188 = vunpack.c.l.b16 %v303
    %v1189 = vunpack.c.h.b16 %v303
    %v1190 = vunpack.c.l.b16 %v304
    %v1191 = vunpack.c.h.b16 %v304
    %v1192 = vunpack.c.l.b16 %v305
    %v1193 = vunpack.c.h.b16 %v305
    %v1194 = vunpack.c.l.b16 %v306
    %v1195 = vunpack.c.h.b16 %v306
    %v1196 = vunpack.c.l.b16 %v307
    %v1197 = vunpack.c.h.b16 %v307
    %v1198 = vunpack.c.l.b16 %v308
    %v1199 = vunpack.c.h.b16 %v308
    %v1200 = vunpack.c.l.b16 %v309
    %v1201 = vunpack.c.h.b16 %v309
    %v1202 = vunpack.c.l.b16 %v310
    %v1203 = vunpack.c.h.b16 %v310
    %v1204 = vunpack.c.l.b16 %v311
    %v1205 = vunpack.c.h.b16 %v311
    %v1206 = vunpack.c.l.b16 %v312
    %v1207 = vunpack.c.h.b16 %v312
    %v1208 = vunpack.c.l.b16 %v313
    %v1209 = vunpack.c.h.b16 %v313
    %v1210 = vunpack.c.l.b16 %v314
    %v1211 = vunpack.c.h.b16 %v314
    %v1212 = vunpack.c.l.b16 %v315
    %v1213 = vunpack.c.h.b16 %v315
    %v1214 = vunpack.c.l.b16 %v316
    %v1215 = vunpack.c.h.b16 %v316
    %v1216 = vunpack.c.l.b16 %v317
    %v1217 = vunpack.c.h.b16 %v317
    %v1218 = vunpack.c.l.b16 %v318
    %v1219 = vunpack.c.h.b16 %v318
    %v1220 = vunpack.c.l.b16 %v319
    %v1221 = vunpack.c.h.b16 %v319
    %v1222 = vunpack.c.l.b16 %v320
    %v1223 = vunpack.c.h.b16 %v320
    %v1224 = vunpack.c.l.b16 %v321
    %v1225 = vunpack.c.h.b16 %v321
    %v1226 = vunpack.c.l.b16 %v322
    %v1227 = vunpack.c.h.b16 %v322
    %v1228 = vunpack.c.l.b16 %v323
    %v1229 = vunpack.c.h.b16 %v323
    %v1230 = vpack.c.b16 %v660, %v654
    %v1231 = vpack.c.b16 %v661, %v655
    %v1232 = vpack.c.b16 %v662, %v656
    %v1233 = vpack.c.b16 %v663, %v657
    %v1234 = vpack.c.b16 %v664, %v658
    %v1235 = vpack.c.b16 %v665, %v659
    %v1236 = vpack.c.b16 %v672, %v666
    %v1237 = vpack.c.b16 %v673, %v667
    %v1238 = vpack.c.b16 %v674, %v668
    %v1239 = vpack.c.b16 %v675, %v669
    %v1240 = vpack.c.b16 %v676, %v670
    %v1241 = vpack.c.b16 %v677, %v671
    %v1242 = vpack.c.b16 %v684, %v678
    %v1243 = vpack.c.b16 %v685, %v679
    %v1244 = vpack.c.b16 %v686, %v680
    %v1245 = vpack.c.b16 %v687, %v681
    %v1246 = vpack.c.b16 %v688, %v682
    %v1247 = vpack.c.b16 %v689, %v683
    %v1248 = vpack.c.b16 %v696, %v690
    %v1249 = vpack.c.b16 %v697, %v691
    %v1250 = vpack.c.b16 %v698, %v692
    %v1251 = vpack.c.b16 %v699, %v693
    %v1252 = vpack.c.b16 %v700, %v694
    %v1253 = vpack.c.b16 %v701, %v695
    %v1254 = vpack.c.b16 %v708, %v702
    %v1255 = vpack.c.b16 %v709, %v703
    %v1256 = vpack.c.b16 %v710, %v704
    %v1257 = vpack.c.b16 %v711, %v705
    %v1258 = vpack.c.b16 %v712, %v706
    %v1259 = vpack.c.b16 %v713, %v707
    %v1260 = vpack.c.b16 %v720, %v714
    %v1261 = vpack.c.b16 %v721, %v715
    %v1262 = vpack.c.b16 %v722, %v716
    %v1263 = vpack.c.b16 %v723, %v717
    %v1264 = vpack.c.b16 %v724, %v718
    %v1265 = vpack.c.b16 %v725, %v719
    %v1266 = vpack.c.b16 %v732, %v726
    %v1267 = vpack.c.b16 %v733, %v727
    %v1268 = vpack.c.b16 %v734, %v728
    %v1269 = vpack.c.b16 %v735, %v729
    %v1270 = vpack.c.b16 %v736, %v730
    %v1271 = vpack.c.b16 %v737, %v731
    %v1272 = vpack.c.b16 %v744, %v738
    %v1273 = vpack.c.b16 %v745, %v739
    %v1274 = vpack.c.b16 %v746, %v740
    %v1275 = vpack.c.b16 %v747, %v741
    %v1276 = vpack.c.b16 %v748, %v742
    %v1277 = vpack.c.b16 %v749, %v743
    %v1278 = vpack.c.b16 %v756, %v750
    %v1279 = vpack.c.b16 %v757, %v751
    %v1280 = vpack.c.b16 %v758, %v752
    %v1281 = vpack.c.b16 %v759, %v753
    %v1282 = vpack.c.b16 %v760, %v754
    %v1283 = vpack.c.b16 %v761, %v755
    %v1284 = vpack.c.b16 %v768, %v762
    %v1285 = vpack.c.b16 %v769, %v763
    %v1286 = vpack.c.b16 %v770, %v764
    %v1287 = vpack.c.b16 %v771, %v765
    %v1288 = vpack.c.b16 %v772, %v766
    %v1289 = vpack.c.b16 %v773, %v767
    %v1290 = vpack.c.b16 %v780, %v774
    %v1291 = vpack.c.b16 %v781, %v775
    %v1292 = vpack.c.b16 %v782, %v776
    %v1293 = vpack.c.b16 %v783, %v777
    %v1294 = vpack.c.b16 %v784, %v778
    %v1295 = vpack.c.b16 %v785, %v779
    %v1296 = vpack.c.b16 %v792, %v786
    %v1297 = vpack.c.b16 %v793, %v787
    %v1298 = vpack.c.b16 %v794, %v788
    %v1299 = vpack.c.b16 %v795, %v789
    %v1300 = vpack.c.b16 %v796, %v790
    %v1301 = vpack.c.b16 %v797, %v791
    %v1302 = vpack.c.b16 %v804, %v798
    %v1303 = vpack.c.b16 %v805, %v799
    %v1304 = vpack.c.b16 %v806, %v800
    %v1305 = vpack.c.b16 %v807, %v801
    %v1306 = vpack.c.b16 %v808, %v802
    %v1307 = vpack.c.b16 %v809, %v803
    %v1308 = vpack.c.b16 %v816, %v810
    %v1309 = vpack.c.b16 %v817, %v811
    %v1310 = vpack.c.b16 %v818, %v812
    %v1311 = vpack.c.b16 %v819, %v813
    %v1312 = vpack.c.b16 %v820, %v814
    %v1313 = vpack.c.b16 %v821, %v815
    %v1314 = vpack.c.b16 %v828, %v822
    %v1315 = vpack.c.b16 %v829, %v823
    %v1316 = vpack.c.b16 %v830, %v824
    %v1317 = vpack.c.b16 %v831, %v825
    %v1318 = vpack.c.b16 %v832, %v826
    %v1319 = vpack.c.b16 %v833, %v827
    %v1320 = vpack.c.b16 %v840, %v834
    %v1321 = vpack.c.b16 %v841, %v835
    %v1322 = vpack.c.b16 %v842, %v836
    %v1323 = vpack.c.b16 %v843, %v837
    %v1324 = vpack.c.b16 %v844, %v838
    %v1325 = vpack.c.b16 %v845, %v839
    %v1326 = vpack.c.b16 %v852, %v846
    %v1327 = vpack.c.b16 %v853, %v847
    %v1328 = vpack.c.b16 %v854, %v848
    %v1329 = vpack.c.b16 %v855, %v849
    %v1330 = vpack.c.b16 %v856, %v850
    %v1331 = vpack.c.b16 %v857, %v851
    %v1332 = vpack.c.b16 %v864, %v858
    %v1333 = vpack.c.b16 %v865, %v859
    %v1334 = vpack.c.b16 %v866, %v860
    %v1335 = vpack.c.b16 %v867, %v861
    %v1336 = vpack.c.b16 %v868, %v862
    %v1337 = vpack.c.b16 %v869, %v863
    %v1338 = vpack.c.b16 %v876, %v870
    %v1339 = vpack.c.b16 %v877, %v871
    %v1340 = vpack.c.b16 %v878, %v872
    %v1341 = vpack.c.b16 %v879, %v873
    %v1342 = vpack.c.b16 %v880, %v874
    %v1343 = vpack.c.b16 %v881, %v875
    %v1344 = vpack.c.b16 %v888, %v882
    %v1345 = vpack.c.b16 %v889, %v883
    %v1346 = vpack.c.b16 %v890, %v884
    %v1347 = vpack.c.b16 %v891, %v885
    %v1348 = vpack.c.b16 %v892, %v886
    %v1349 = vpack.c.b16 %v893, %v887
    %v1350 = vpack.c.b16 %v900, %v894
    %v1351 = vpack.c.b16 %v901, %v895
    %v1352 = vpack.c.b16 %v902, %v896
    %v1353 = vpack.c.b16 %v903, %v897
    %v1354 = vpack.c.b16 %v904, %v898
    %v1355 = vpack.c.b16 %v905, %v899
    %v1356 = vpack.c.b16 %v912, %v906
    %v1357 = vpack.c.b16 %v913, %v907
    %v1358 = vpack.c.b16 %v914, %v908
    %v1359 = vpack.c.b16 %v915, %v909
    %v1360 = vpack.c.b16 %v916, %v910
    %v1361 = vpack.c.b16 %v917, %v911
    %v1362 = vpack.c.b16 %v924, %v918
    %v1363 = vpack.c.b16 %v925, %v919
    %v1364 = vpack.c.b16 %v926, %v920
    %v1365 = vpack.c.b16 %v927, %v921
    %v1366 = vpack.c.b16 %v928, %v922
    %v1367 = vpack.c.b16 %v929, %v923
    %v1368 = vpack.c.b16 %v936, %v930
    %v1369 = vpack.c.b16 %v937, %v931
    %v1370 = vpack.c.b16 %v938, %v932
    %v1371 = vpack.c.b16 %v939, %v933
    %v1372 = vpack.c.b16 %v940, %v934
    %v1373 = vpack.c.b16 %v941, %v935
    %v1374 = vpack.c.b16 %v948, %v942
    %v1375 = vpack.c.b16 %v949, %v943
    %v1376 = vpack.c.b16 %v950, %v944
    %v1377 = vpack.c.b16 %v951, %v945
    %v1378 = vpack.c.b16 %v952, %v946
    %v1379 = vpack.c.b16 %v953, %v947
    %v1380 = vpack.c.b16 %v960, %v954
    %v1381 = vpack.c.b16 %v961, %v955
    %v1382 = vpack.c.b16 %v962, %v956
    %v1383 = vpack.c.b16 %v963, %v957
    %v1384 = vpack.c.b16 %v964, %v958
    %v1385 = vpack.c.b16 %v965, %v959
    %v1386 = vpack.c.b16 %v972, %v966
    %v1387 = vpack.c.b16 %v973, %v967
    %v1388 = vpack.c.b16 %v974, %v968
    %v1389 = vpack.c.b16 %v975, %v969
    %v1390 = vpack.c.b16 %v976, %v970
    %v1391 = vpack.c.b16 %v977, %v971
    %v1392 = vpack.c.b16 %v984, %v978
    %v1393 = vpack.c.b16 %v985, %v979
    %v1394 = vpack.c.b16 %v986, %v980
    %v1395 = vpack.c.b16 %v987, %v981
    %v1396 = vpack.c.b16 %v988, %v982
    %v1397 = vpack.c.b16 %v989, %v983
    %v1398 = vpack.c.b16 %v996, %v990
    %v1399 = vpack.c.b16 %v997, %v991
    %v1400 = vpack.c.b16 %v998, %v992
    %v1401 = vpack.c.b16 %v999, %v993
    %v1402 = vpack.c.b16 %v1000, %v994
    %v1403 = vpack.c.b16 %v1001, %v995
    %v1404 = vpack.c.b16 %v1008, %v1002
    %v1405 = vpack.c.b16 %v1009, %v1003
    %v1406 = vpack.c.b16 %v1010, %v1004
    %v1407 = vpack.c.b16 %v1011, %v1005
    %v1408 = vpack.c.b16 %v1012, %v1006
    %v1409 = vpack.c.b16 %v1013, %v1007
    %v1410 = vpack.c.b16 %v1020, %v1014
    %v1411 = vpack.c.b16 %v1021, %v1015
    %v1412 = vpack.c.b16 %v1022, %v1016
    %v1413 = vpack.c.b16 %v1023, %v1017
    %v1414 = vpack.c.b16 %v1024, %v1018
    %v1415 = vpack.c.b16 %v1025, %v1019
    %v1416 = vpack.c.b16 %v1032, %v1026
    %v1417 = vpack.c.b16 %v1033, %v1027
    %v1418 = vpack.c.b16 %v1034, %v1028
    %v1419 = vpack.c.b16 %v1035, %v1029
    %v1420 = vpack.c.b16 %v1036, %v1030
    %v1421 = vpack.c.b16 %v1037, %v1031
    %v1422 = vpack.c.b16 %v1044, %v1038
    %v1423 = vpack.c.b16 %v1045, %v1039
    %v1424 = vpack.c.b16 %v1046, %v1040
    %v1425 = vpack.c.b16 %v1047, %v1041
    %v1426 = vpack.c.b16 %v1048, %v1042
    %v1427 = vpack.c.b16 %v1049, %v1043
    %v1428 = vpack.c.b16 %v1056, %v1050
    %v1429 = vpack.c.b16 %v1057, %v1051
    %v1430 = vpack.c.b16 %v1058, %v1052
    %v1431 = vpack.c.b16 %v1059, %v1053
    %v1432 = vpack.c.b16 %v1060, %v1054
    %v1433 = vpack.c.b16 %v1061, %v1055
    %v1434 = vpack.c.b16 %v1068, %v1062
    %v1435 = vpack.c.b16 %v1069, %v1063
    %v1436 = vpack.c.b16 %v1070, %v1064
    %v1437 = vpack.c.b16 %v1071, %v1065
    %v1438 = vpack.c.b16 %v1072, %v1066
    %v1439 = vpack.c.b16 %v1073, %v1067
    %v1440 = vpack.c.b16 %v1080, %v1074
    %v1441 = vpack.c.b16 %v1081, %v1075
    %v1442 = vpack.c.b16 %v1082, %v1076
    %v1443 = vpack.c.b16 %v1083, %v1077
    %v1444 = vpack.c.b16 %v1084, %v1078
    %v1445 = vpack.c.b16 %v1085, %v1079
    %v1446 = vpack.c.b16 %v1092, %v1086
    %v1447 = vpack.c.b16 %v1093, %v1087
    %v1448 = vpack.c.b16 %v1094, %v1088
    %v1449 = vpack.c.b16 %v1095, %v1089
    %v1450 = vpack.c.b16 %v1096, %v1090
    %v1451 = vpack.c.b16 %v1097, %v1091
    %v1452 = vpack.c.b16 %v1104, %v1098
    %v1453 = vpack.c.b16 %v1105, %v1099
    %v1454 = vpack.c.b16 %v1106, %v1100
    %v1455 = vpack.c.b16 %v1107, %v1101
    %v1456 = vpack.c.b16 %v1108, %v1102
    %v1457 = vpack.c.b16 %v1109, %v1103
    %v1458 = vpack.c.b16 %v1116, %v1110
    %v1459 = vpack.c.b16 %v1117, %v1111
    %v1460 = vpack.c.b16 %v1118, %v1112
    %v1461 = vpack.c.b16 %v1119, %v1113
    %v1462 = vpack.c.b16 %v1120, %v1114
    %v1463 = vpack.c.b16 %v1121, %v1115
    %v1464 = vpack.c.b16 %v1128, %v1122
    %v1465 = vpack.c.b16 %v1129, %v1123
    %v1466 = vpack.c.b16 %v1130, %v1124
    %v1467 = vpack.c.b16 %v1131, %v1125
    %v1468 = vpack.c.b16 %v1132, %v1126
    %v1469 = vpack.c.b16 %v1133, %v1127
    %v1470 = vpack.c.b16 %v1140, %v1134
    %v1471 = vpack.c.b16 %v1141, %v1135
    %v1472 = vpack.c.b16 %v1142, %v1136
    %v1473 = vpack.c.b16 %v1143, %v1137
    %v1474 = vpack.c.b16 %v1144, %v1138
    %v1475 = vpack.c.b16 %v1145, %v1139
    %v1476 = vpack.c.b16 %v1152, %v1146
    %v1477 = vpack.c.b16 %v1153, %v1147
    %v1478 = vpack.c.b16 %v1154, %v1148
    %v1479 = vpack.c.b16 %v1155, %v1149
    %v1480 = vpack.c.b16 %v1156, %v1150
    %v1481 = vpack.c.b16 %v1157, %v1151
    %v1482 = vpack.c.b16 %v1164, %v1158
    %v1483 = vpack.c.b16 %v1165, %v1159
    %v1484 = vpack.c.b16 %v1166, %v1160
    %v1485 = vpack.c.b16 %v1167, %v1161
    %v1486 = vpack.c.b16 %v1168, %v1162
    %v1487 = vpack.c.b16 %v1169, %v1163
    %v1488 = vpack.c.b16 %v1176, %v1170
    %v1489 = vpack.c.b16 %v1177, %v1171
    %v1490 = vpack.c.b16 %v1178, %v1172
    %v1491 = vpack.c.b16 %v1179, %v1173
    %v1492 = vpack.c.b16 %v1180, %v1174
    %v1493 = vpack.c.b16 %v1181, %v1175
    %v1494 = vpack.c.b16 %v1188, %v1182
    %v1495 = vpack.c.b16 %v1189, %v1183
    %v1496 = vpack.c.b16 %v1190, %v1184
    %v1497 = vpack.c.b16 %v1191, %v1185
    %v1498 = vpack.c.b16 %v1192, %v1186
    %v1499 = vpack.c.b16 %v1193, %v1187
    %v1500 = vpack.c.b16 %v1200, %v1194
    %v1501 = vpack.c.b16 %v1201, %v1195
    %v1502 = vpack.c.b16 %v1202, %v1196
    %v1503 = vpack.c.b16 %v1203, %v1197
    %v1504 = vpack.c.b16 %v1204, %v1198
    %v1505 = vpack.c.b16 %v1205, %v1199
    %v1506 = vpack.c.b16 %v1212, %v1206
    %v1507 = vpack.c.b16 %v1213, %v1207
    %v1508 = vpack.c.b16 %v1214, %v1208
    %v1509 = vpack.c.b16 %v1215, %v1209
    %v1510 = vpack.c.b16 %v1216, %v1210
    %v1511 = vpack.c.b16 %v1217, %v1211
    %v1512 = vpack.c.b16 %v1224, %v1218
    %v1513 = vpack.c.b16 %v1225, %v1219
    %v1514 = vpack.c.b16 %v1226, %v1220
    %v1515 = vpack.c.b16 %v1227, %v1221
    %v1516 = vpack.c.b16 %v1228, %v1222
    %v1517 = vpack.c.b16 %v1229, %v1223
    %1806 = vmatpush.bf16.msra.mxu0 %v1272
    %1807 = vmatpush.bf16.msra.mxu0 %v1266
    %1808 = vmatpush.bf16.msra.mxu0 %v1260
    %1809 = vmatpush.bf16.msra.mxu0 %v1254
    %1810 = vmatpush.bf16.msra.mxu0 %v1248
    %1811 = vmatpush.bf16.msra.mxu0 %v1242
    %1812 = vmatpush.bf16.msra.mxu0 %v1236
    %1813 = vmatpush.bf16.msra.mxu0 %v1230
    %1814 = vmatmul.bf16.gmra.mxu0 %v30
    %v1815 = vpop.f32.mrf.mxu0
    %v1816 = vadd.f32 %v354, %v1815
    %v1817 = vpop.f32.mrf.mxu0
    %v1818 = vadd.f32 %v360, %v1817
    %1819 = vdwg.mxu0
    %1820 = vmatpush.bf16.msra.mxu0 %v1320
    %1821 = vmatpush.bf16.msra.mxu0 %v1314
    %1822 = vmatpush.bf16.msra.mxu0 %v1308
    %1823 = vmatpush.bf16.msra.mxu0 %v1302
    %1824 = vmatpush.bf16.msra.mxu0 %v1296
    %1825 = vmatpush.bf16.msra.mxu0 %v1290
    %1826 = vmatpush.bf16.msra.mxu0 %v1284
    %1827 = vmatpush.bf16.msra.mxu0 %v1278
    %1828 = vmatmul.bf16.gmra.mxu0 %v31
    %v1829 = vpop.f32.mrf.mxu0
    %v1830 = vadd.f32 %v1816, %v1829
    %v1831 = vpop.f32.mrf.mxu0
    %v1832 = vadd.f32 %v1818, %v1831
    %1833 = vdwg.mxu0
    %1834 = vmatpush.bf16.msra.mxu0 %v1368
    %1835 = vmatpush.bf16.msra.mxu0 %v1362
    %1836 = vmatpush.bf16.msra.mxu0 %v1356
    %1837 = vmatpush.bf16.msra.mxu0 %v1350
    %1838 = vmatpush.bf16.msra.mxu0 %v1344
    %1839 = vmatpush.bf16.msra.mxu0 %v1338
    %1840 = vmatpush.bf16.msra.mxu0 %v1332
    %1841 = vmatpush.bf16.msra.mxu0 %v1326
    %1842 = vmatmul.bf16.gmra.mxu0 %v32
    %v1843 = vpop.f32.mrf.mxu0
    %v1844 = vadd.f32 %v1830, %v1843
    %v1845 = vpop.f32.mrf.mxu0
    %v1846 = vadd.f32 %v1832, %v1845
    %1847 = vdwg.mxu0
    %1848 = vmatpush.bf16.msra.mxu0 %v1416
    %1849 = vmatpush.bf16.msra.mxu0 %v1410
    %1850 = vmatpush.bf16.msra.mxu0 %v1404
    %1851 = vmatpush.bf16.msra.mxu0 %v1398
    %1852 = vmatpush.bf16.msra.mxu0 %v1392
    %1853 = vmatpush.bf16.msra.mxu0 %v1386
    %1854 = vmatpush.bf16.msra.mxu0 %v1380
    %1855 = vmatpush.bf16.msra.mxu0 %v1374
    %1856 = vmatmul.bf16.gmra.mxu0 %v33
    %v1857 = vpop.f32.mrf.mxu0
    %v1858 = vadd.f32 %v1844, %v1857
    %v1859 = vpop.f32.mrf.mxu0
    %v1860 = vadd.f32 %v1846, %v1859
    %1861 = vdwg.mxu0
    %1862 = vmatpush.bf16.msra.mxu0 %v1464
    %1863 = vmatpush.bf16.msra.mxu0 %v1458
    %1864 = vmatpush.bf16.msra.mxu0 %v1452
    %1865 = vmatpush.bf16.msra.mxu0 %v1446
    %1866 = vmatpush.bf16.msra.mxu0 %v1440
    %1867 = vmatpush.bf16.msra.mxu0 %v1434
    %1868 = vmatpush.bf16.msra.mxu0 %v1428
    %1869 = vmatpush.bf16.msra.mxu0 %v1422
    %1870 = vmatmul.bf16.gmra.mxu0 %v34
    %v1871 = vpop.f32.mrf.mxu0
    %v1872 = vadd.f32 %v1858, %v1871
    %v1873 = vpop.f32.mrf.mxu0
    %v1874 = vadd.f32 %v1860, %v1873
    %1875 = vdwg.mxu0
    %1876 = vmatpush.bf16.msra.mxu0 %v1512
    %1877 = vmatpush.bf16.msra.mxu0 %v1506
    %1878 = vmatpush.bf16.msra.mxu0 %v1500
    %1879 = vmatpush.bf16.msra.mxu0 %v1494
    %1880 = vmatpush.bf16.msra.mxu0 %v1488
    %1881 = vmatpush.bf16.msra.mxu0 %v1482
    %1882 = vmatpush.bf16.msra.mxu0 %v1476
    %1883 = vmatpush.bf16.msra.mxu0 %v1470
    %1884 = vmatmul.bf16.gmra.mxu0 %v35
    %v1885 = vpop.f32.mrf.mxu0
    %v1886 = vadd.f32 %v1872, %v1885
    %v1887 = vpop.f32.mrf.mxu0
    %v1888 = vadd.f32 %v1874, %v1887
    %1889 = vdwg.mxu0
    %1890 = vmatpush.bf16.msra.mxu0 %v1273
    %1891 = vmatpush.bf16.msra.mxu0 %v1267
    %1892 = vmatpush.bf16.msra.mxu0 %v1261
    %1893 = vmatpush.bf16.msra.mxu0 %v1255
    %1894 = vmatpush.bf16.msra.mxu0 %v1249
    %1895 = vmatpush.bf16.msra.mxu0 %v1243
    %1896 = vmatpush.bf16.msra.mxu0 %v1237
    %1897 = vmatpush.bf16.msra.mxu0 %v1231
    %1898 = vmatmul.bf16.gmra.mxu0 %v30
    %v1899 = vpop.f32.mrf.mxu0
    %v1900 = vadd.f32 %v355, %v1899
    %v1901 = vpop.f32.mrf.mxu0
    %v1902 = vadd.f32 %v361, %v1901
    %1903 = vdwg.mxu0
    %1904 = vmatpush.bf16.msra.mxu0 %v1321
    %1905 = vmatpush.bf16.msra.mxu0 %v1315
    %1906 = vmatpush.bf16.msra.mxu0 %v1309
    %1907 = vmatpush.bf16.msra.mxu0 %v1303
    %1908 = vmatpush.bf16.msra.mxu0 %v1297
    %1909 = vmatpush.bf16.msra.mxu0 %v1291
    %1910 = vmatpush.bf16.msra.mxu0 %v1285
    %1911 = vmatpush.bf16.msra.mxu0 %v1279
    %1912 = vmatmul.bf16.gmra.mxu0 %v31
    %v1913 = vpop.f32.mrf.mxu0
    %v1914 = vadd.f32 %v1900, %v1913
    %v1915 = vpop.f32.mrf.mxu0
    %v1916 = vadd.f32 %v1902, %v1915
    %1917 = vdwg.mxu0
    %1918 = vmatpush.bf16.msra.mxu0 %v1369
    %1919 = vmatpush.bf16.msra.mxu0 %v1363
    %1920 = vmatpush.bf16.msra.mxu0 %v1357
    %1921 = vmatpush.bf16.msra.mxu0 %v1351
    %1922 = vmatpush.bf16.msra.mxu0 %v1345
    %1923 = vmatpush.bf16.msra.mxu0 %v1339
    %1924 = vmatpush.bf16.msra.mxu0 %v1333
    %1925 = vmatpush.bf16.msra.mxu0 %v1327
    %1926 = vmatmul.bf16.gmra.mxu0 %v32
    %v1927 = vpop.f32.mrf.mxu0
    %v1928 = vadd.f32 %v1914, %v1927
    %v1929 = vpop.f32.mrf.mxu0
    %v1930 = vadd.f32 %v1916, %v1929
    %1931 = vdwg.mxu0
    %1932 = vmatpush.bf16.msra.mxu0 %v1417
    %1933 = vmatpush.bf16.msra.mxu0 %v1411
    %1934 = vmatpush.bf16.msra.mxu0 %v1405
    %1935 = vmatpush.bf16.msra.mxu0 %v1399
    %1936 = vmatpush.bf16.msra.mxu0 %v1393
    %1937 = vmatpush.bf16.msra.mxu0 %v1387
    %1938 = vmatpush.bf16.msra.mxu0 %v1381
    %1939 = vmatpush.bf16.msra.mxu0 %v1375
    %1940 = vmatmul.bf16.gmra.mxu0 %v33
    %v1941 = vpop.f32.mrf.mxu0
    %v1942 = vadd.f32 %v1928, %v1941
    %v1943 = vpop.f32.mrf.mxu0
    %v1944 = vadd.f32 %v1930, %v1943
    %1945 = vdwg.mxu0
    %1946 = vmatpush.bf16.msra.mxu0 %v1465
    %1947 = vmatpush.bf16.msra.mxu0 %v1459
    %1948 = vmatpush.bf16.msra.mxu0 %v1453
    %1949 = vmatpush.bf16.msra.mxu0 %v1447
    %1950 = vmatpush.bf16.msra.mxu0 %v1441
    %1951 = vmatpush.bf16.msra.mxu0 %v1435
    %1952 = vmatpush.bf16.msra.mxu0 %v1429
    %1953 = vmatpush.bf16.msra.mxu0 %v1423
    %1954 = vmatmul.bf16.gmra.mxu0 %v34
    %v1955 = vpop.f32.mrf.mxu0
    %v1956 = vadd.f32 %v1942, %v1955
    %v1957 = vpop.f32.mrf.mxu0
    %v1958 = vadd.f32 %v1944, %v1957
    %1959 = vdwg.mxu0
    %1960 = vmatpush.bf16.msra.mxu0 %v1513
    %1961 = vmatpush.bf16.msra.mxu0 %v1507
    %1962 = vmatpush.bf16.msra.mxu0 %v1501
    %1963 = vmatpush.bf16.msra.mxu0 %v1495
    %1964 = vmatpush.bf16.msra.mxu0 %v1489
    %1965 = vmatpush.bf16.msra.mxu0 %v1483
    %1966 = vmatpush.bf16.msra.mxu0 %v1477
    %1967 = vmatpush.bf16.msra.mxu0 %v1471
    %1968 = vmatmul.bf16.gmra.mxu0 %v35
    %v1969 = vpop.f32.mrf.mxu0
    %v1970 = vadd.f32 %v1956, %v1969
    %v1971 = vpop.f32.mrf.mxu0
    %v1972 = vadd.f32 %v1958, %v1971
    %1973 = vdwg.mxu0
    %1974 = vmatpush.bf16.msra.mxu0 %v1274
    %1975 = vmatpush.bf16.msra.mxu0 %v1268
    %1976 = vmatpush.bf16.msra.mxu0 %v1262
    %1977 = vmatpush.bf16.msra.mxu0 %v1256
    %1978 = vmatpush.bf16.msra.mxu0 %v1250
    %1979 = vmatpush.bf16.msra.mxu0 %v1244
    %1980 = vmatpush.bf16.msra.mxu0 %v1238
    %1981 = vmatpush.bf16.msra.mxu0 %v1232
    %1982 = vmatmul.bf16.gmra.mxu0 %v30
    %v1983 = vpop.f32.mrf.mxu0
    %v1984 = vadd.f32 %v356, %v1983
    %v1985 = vpop.f32.mrf.mxu0
    %v1986 = vadd.f32 %v362, %v1985
    %1987 = vdwg.mxu0
    %1988 = vmatpush.bf16.msra.mxu0 %v1322
    %1989 = vmatpush.bf16.msra.mxu0 %v1316
    %1990 = vmatpush.bf16.msra.mxu0 %v1310
    %1991 = vmatpush.bf16.msra.mxu0 %v1304
    %1992 = vmatpush.bf16.msra.mxu0 %v1298
    %1993 = vmatpush.bf16.msra.mxu0 %v1292
    %1994 = vmatpush.bf16.msra.mxu0 %v1286
    %1995 = vmatpush.bf16.msra.mxu0 %v1280
    %1996 = vmatmul.bf16.gmra.mxu0 %v31
    %v1997 = vpop.f32.mrf.mxu0
    %v1998 = vadd.f32 %v1984, %v1997
    %v1999 = vpop.f32.mrf.mxu0
    %v2000 = vadd.f32 %v1986, %v1999
    %2001 = vdwg.mxu0
    %2002 = vmatpush.bf16.msra.mxu0 %v1370
    %2003 = vmatpush.bf16.msra.mxu0 %v1364
    %2004 = vmatpush.bf16.msra.mxu0 %v1358
    %2005 = vmatpush.bf16.msra.mxu0 %v1352
    %2006 = vmatpush.bf16.msra.mxu0 %v1346
    %2007 = vmatpush.bf16.msra.mxu0 %v1340
    %2008 = vmatpush.bf16.msra.mxu0 %v1334
    %2009 = vmatpush.bf16.msra.mxu0 %v1328
    %2010 = vmatmul.bf16.gmra.mxu0 %v32
    %v2011 = vpop.f32.mrf.mxu0
    %v2012 = vadd.f32 %v1998, %v2011
    %v2013 = vpop.f32.mrf.mxu0
    %v2014 = vadd.f32 %v2000, %v2013
    %2015 = vdwg.mxu0
    %2016 = vmatpush.bf16.msra.mxu0 %v1418
    %2017 = vmatpush.bf16.msra.mxu0 %v1412
    %2018 = vmatpush.bf16.msra.mxu0 %v1406
    %2019 = vmatpush.bf16.msra.mxu0 %v1400
    %2020 = vmatpush.bf16.msra.mxu0 %v1394
    %2021 = vmatpush.bf16.msra.mxu0 %v1388
    %2022 = vmatpush.bf16.msra.mxu0 %v1382
    %2023 = vmatpush.bf16.msra.mxu0 %v1376
    %2024 = vmatmul.bf16.gmra.mxu0 %v33
    %v2025 = vpop.f32.mrf.mxu0
    %v2026 = vadd.f32 %v2012, %v2025
    %v2027 = vpop.f32.mrf.mxu0
    %v2028 = vadd.f32 %v2014, %v2027
    %2029 = vdwg.mxu0
    %2030 = vmatpush.bf16.msra.mxu0 %v1466
    %2031 = vmatpush.bf16.msra.mxu0 %v1460
    %2032 = vmatpush.bf16.msra.mxu0 %v1454
    %2033 = vmatpush.bf16.msra.mxu0 %v1448
    %2034 = vmatpush.bf16.msra.mxu0 %v1442
    %2035 = vmatpush.bf16.msra.mxu0 %v1436
    %2036 = vmatpush.bf16.msra.mxu0 %v1430
    %2037 = vmatpush.bf16.msra.mxu0 %v1424
    %2038 = vmatmul.bf16.gmra.mxu0 %v34
    %v2039 = vpop.f32.mrf.mxu0
    %v2040 = vadd.f32 %v2026, %v2039
    %v2041 = vpop.f32.mrf.mxu0
    %v2042 = vadd.f32 %v2028, %v2041
    %2043 = vdwg.mxu0
    %2044 = vmatpush.bf16.msra.mxu0 %v1514
    %2045 = vmatpush.bf16.msra.mxu0 %v1508
    %2046 = vmatpush.bf16.msra.mxu0 %v1502
    %2047 = vmatpush.bf16.msra.mxu0 %v1496
    %2048 = vmatpush.bf16.msra.mxu0 %v1490
    %2049 = vmatpush.bf16.msra.mxu0 %v1484
    %2050 = vmatpush.bf16.msra.mxu0 %v1478
    %2051 = vmatpush.bf16.msra.mxu0 %v1472
    %2052 = vmatmul.bf16.gmra.mxu0 %v35
    %v2053 = vpop.f32.mrf.mxu0
    %v2054 = vadd.f32 %v2040, %v2053
    %v2055 = vpop.f32.mrf.mxu0
    %v2056 = vadd.f32 %v2042, %v2055
    %2057 = vdwg.mxu0
    %2058 = vmatpush.bf16.msra.mxu0 %v1275
    %2059 = vmatpush.bf16.msra.mxu0 %v1269
    %2060 = vmatpush.bf16.msra.mxu0 %v1263
    %2061 = vmatpush.bf16.msra.mxu0 %v1257
    %2062 = vmatpush.bf16.msra.mxu0 %v1251
    %2063 = vmatpush.bf16.msra.mxu0 %v1245
    %2064 = vmatpush.bf16.msra.mxu0 %v1239
    %2065 = vmatpush.bf16.msra.mxu0 %v1233
    %2066 = vmatmul.bf16.gmra.mxu0 %v30
    %v2067 = vpop.f32.mrf.mxu0
    %v2068 = vadd.f32 %v357, %v2067
    %v2069 = vpop.f32.mrf.mxu0
    %v2070 = vadd.f32 %v363, %v2069
    %2071 = vdwg.mxu0
    %2072 = vmatpush.bf16.msra.mxu0 %v1323
    %2073 = vmatpush.bf16.msra.mxu0 %v1317
    %2074 = vmatpush.bf16.msra.mxu0 %v1311
    %2075 = vmatpush.bf16.msra.mxu0 %v1305
    %2076 = vmatpush.bf16.msra.mxu0 %v1299
    %2077 = vmatpush.bf16.msra.mxu0 %v1293
    %2078 = vmatpush.bf16.msra.mxu0 %v1287
    %2079 = vmatpush.bf16.msra.mxu0 %v1281
    %2080 = vmatmul.bf16.gmra.mxu0 %v31
    %v2081 = vpop.f32.mrf.mxu0
    %v2082 = vadd.f32 %v2068, %v2081
    %v2083 = vpop.f32.mrf.mxu0
    %v2084 = vadd.f32 %v2070, %v2083
    %2085 = vdwg.mxu0
    %2086 = vmatpush.bf16.msra.mxu0 %v1371
    %2087 = vmatpush.bf16.msra.mxu0 %v1365
    %2088 = vmatpush.bf16.msra.mxu0 %v1359
    %2089 = vmatpush.bf16.msra.mxu0 %v1353
    %2090 = vmatpush.bf16.msra.mxu0 %v1347
    %2091 = vmatpush.bf16.msra.mxu0 %v1341
    %2092 = vmatpush.bf16.msra.mxu0 %v1335
    %2093 = vmatpush.bf16.msra.mxu0 %v1329
    %2094 = vmatmul.bf16.gmra.mxu0 %v32
    %v2095 = vpop.f32.mrf.mxu0
    %v2096 = vadd.f32 %v2082, %v2095
    %v2097 = vpop.f32.mrf.mxu0
    %v2098 = vadd.f32 %v2084, %v2097
    %2099 = vdwg.mxu0
    %2100 = vmatpush.bf16.msra.mxu0 %v1419
    %2101 = vmatpush.bf16.msra.mxu0 %v1413
    %2102 = vmatpush.bf16.msra.mxu0 %v1407
    %2103 = vmatpush.bf16.msra.mxu0 %v1401
    %2104 = vmatpush.bf16.msra.mxu0 %v1395
    %2105 = vmatpush.bf16.msra.mxu0 %v1389
    %2106 = vmatpush.bf16.msra.mxu0 %v1383
    %2107 = vmatpush.bf16.msra.mxu0 %v1377
    %2108 = vmatmul.bf16.gmra.mxu0 %v33
    %v2109 = vpop.f32.mrf.mxu0
    %v2110 = vadd.f32 %v2096, %v2109
    %v2111 = vpop.f32.mrf.mxu0
    %v2112 = vadd.f32 %v2098, %v2111
    %2113 = vdwg.mxu0
    %2114 = vmatpush.bf16.msra.mxu0 %v1467
    %2115 = vmatpush.bf16.msra.mxu0 %v1461
    %2116 = vmatpush.bf16.msra.mxu0 %v1455
    %2117 = vmatpush.bf16.msra.mxu0 %v1449
    %2118 = vmatpush.bf16.msra.mxu0 %v1443
    %2119 = vmatpush.bf16.msra.mxu0 %v1437
    %2120 = vmatpush.bf16.msra.mxu0 %v1431
    %2121 = vmatpush.bf16.msra.mxu0 %v1425
    %2122 = vmatmul.bf16.gmra.mxu0 %v34
    %v2123 = vpop.f32.mrf.mxu0
    %v2124 = vadd.f32 %v2110, %v2123
    %v2125 = vpop.f32.mrf.mxu0
    %v2126 = vadd.f32 %v2112, %v2125
    %2127 = vdwg.mxu0
    %2128 = vmatpush.bf16.msra.mxu0 %v1515
    %2129 = vmatpush.bf16.msra.mxu0 %v1509
    %2130 = vmatpush.bf16.msra.mxu0 %v1503
    %2131 = vmatpush.bf16.msra.mxu0 %v1497
    %2132 = vmatpush.bf16.msra.mxu0 %v1491
    %2133 = vmatpush.bf16.msra.mxu0 %v1485
    %2134 = vmatpush.bf16.msra.mxu0 %v1479
    %2135 = vmatpush.bf16.msra.mxu0 %v1473
    %2136 = vmatmul.bf16.gmra.mxu0 %v35
    %v2137 = vpop.f32.mrf.mxu0
    %v2138 = vadd.f32 %v2124, %v2137
    %v2139 = vpop.f32.mrf.mxu0
    %v2140 = vadd.f32 %v2126, %v2139
    %2141 = vdwg.mxu0
    %2142 = vmatpush.bf16.msra.mxu0 %v1276
    %2143 = vmatpush.bf16.msra.mxu0 %v1270
    %2144 = vmatpush.bf16.msra.mxu0 %v1264
    %2145 = vmatpush.bf16.msra.mxu0 %v1258
    %2146 = vmatpush.bf16.msra.mxu0 %v1252
    %2147 = vmatpush.bf16.msra.mxu0 %v1246
    %2148 = vmatpush.bf16.msra.mxu0 %v1240
    %2149 = vmatpush.bf16.msra.mxu0 %v1234
    %2150 = vmatmul.bf16.gmra.mxu0 %v30
    %v2151 = vpop.f32.mrf.mxu0
    %v2152 = vadd.f32 %v358, %v2151
    %v2153 = vpop.f32.mrf.mxu0
    %v2154 = vadd.f32 %v364, %v2153
    %2155 = vdwg.mxu0
    %2156 = vmatpush.bf16.msra.mxu0 %v1324
    %2157 = vmatpush.bf16.msra.mxu0 %v1318
    %2158 = vmatpush.bf16.msra.mxu0 %v1312
    %2159 = vmatpush.bf16.msra.mxu0 %v1306
    %2160 = vmatpush.bf16.msra.mxu0 %v1300
    %2161 = vmatpush.bf16.msra.mxu0 %v1294
    %2162 = vmatpush.bf16.msra.mxu0 %v1288
    %2163 = vmatpush.bf16.msra.mxu0 %v1282
    %2164 = vmatmul.bf16.gmra.mxu0 %v31
    %v2165 = vpop.f32.mrf.mxu0
    %v2166 = vadd.f32 %v2152, %v2165
    %v2167 = vpop.f32.mrf.mxu0
    %v2168 = vadd.f32 %v2154, %v2167
    %2169 = vdwg.mxu0
    %2170 = vmatpush.bf16.msra.mxu0 %v1372
    %2171 = vmatpush.bf16.msra.mxu0 %v1366
    %2172 = vmatpush.bf16.msra.mxu0 %v1360
    %2173 = vmatpush.bf16.msra.mxu0 %v1354
    %2174 = vmatpush.bf16.msra.mxu0 %v1348
    %2175 = vmatpush.bf16.msra.mxu0 %v1342
    %2176 = vmatpush.bf16.msra.mxu0 %v1336
    %2177 = vmatpush.bf16.msra.mxu0 %v1330
    %2178 = vmatmul.bf16.gmra.mxu0 %v32
    %v2179 = vpop.f32.mrf.mxu0
    %v2180 = vadd.f32 %v2166, %v2179
    %v2181 = vpop.f32.mrf.mxu0
    %v2182 = vadd.f32 %v2168, %v2181
    %2183 = vdwg.mxu0
    %2184 = vmatpush.bf16.msra.mxu0 %v1420
    %2185 = vmatpush.bf16.msra.mxu0 %v1414
    %2186 = vmatpush.bf16.msra.mxu0 %v1408
    %2187 = vmatpush.bf16.msra.mxu0 %v1402
    %2188 = vmatpush.bf16.msra.mxu0 %v1396
    %2189 = vmatpush.bf16.msra.mxu0 %v1390
    %2190 = vmatpush.bf16.msra.mxu0 %v1384
    %2191 = vmatpush.bf16.msra.mxu0 %v1378
    %2192 = vmatmul.bf16.gmra.mxu0 %v33
    %v2193 = vpop.f32.mrf.mxu0
    %v2194 = vadd.f32 %v2180, %v2193
    %v2195 = vpop.f32.mrf.mxu0
    %v2196 = vadd.f32 %v2182, %v2195
    %2197 = vdwg.mxu0
    %2198 = vmatpush.bf16.msra.mxu0 %v1468
    %2199 = vmatpush.bf16.msra.mxu0 %v1462
    %2200 = vmatpush.bf16.msra.mxu0 %v1456
    %2201 = vmatpush.bf16.msra.mxu0 %v1450
    %2202 = vmatpush.bf16.msra.mxu0 %v1444
    %2203 = vmatpush.bf16.msra.mxu0 %v1438
    %2204 = vmatpush.bf16.msra.mxu0 %v1432
    %2205 = vmatpush.bf16.msra.mxu0 %v1426
    %2206 = vmatmul.bf16.gmra.mxu0 %v34
    %v2207 = vpop.f32.mrf.mxu0
    %v2208 = vadd.f32 %v2194, %v2207
    %v2209 = vpop.f32.mrf.mxu0
    %v2210 = vadd.f32 %v2196, %v2209
    %2211 = vdwg.mxu0
    %2212 = vmatpush.bf16.msra.mxu0 %v1516
    %2213 = vmatpush.bf16.msra.mxu0 %v1510
    %2214 = vmatpush.bf16.msra.mxu0 %v1504
    %2215 = vmatpush.bf16.msra.mxu0 %v1498
    %2216 = vmatpush.bf16.msra.mxu0 %v1492
    %2217 = vmatpush.bf16.msra.mxu0 %v1486
    %2218 = vmatpush.bf16.msra.mxu0 %v1480
    %2219 = vmatpush.bf16.msra.mxu0 %v1474
    %2220 = vmatmul.bf16.gmra.mxu0 %v35
    %v2221 = vpop.f32.mrf.mxu0
    %v2222 = vadd.f32 %v2208, %v2221
    %v2223 = vpop.f32.mrf.mxu0
    %v2224 = vadd.f32 %v2210, %v2223
    %2225 = vdwg.mxu0
    %2226 = vmatpush.bf16.msra.mxu0 %v1277
    %2227 = vmatpush.bf16.msra.mxu0 %v1271
    %2228 = vmatpush.bf16.msra.mxu0 %v1265
    %2229 = vmatpush.bf16.msra.mxu0 %v1259
    %2230 = vmatpush.bf16.msra.mxu0 %v1253
    %2231 = vmatpush.bf16.msra.mxu0 %v1247
    %2232 = vmatpush.bf16.msra.mxu0 %v1241
    %2233 = vmatpush.bf16.msra.mxu0 %v1235
    %2234 = vmatmul.bf16.gmra.mxu0 %v30
    %v2235 = vpop.f32.mrf.mxu0
    %v2236 = vadd.f32 %v359, %v2235
    %v2237 = vpop.f32.mrf.mxu0
    %v2238 = vadd.f32 %v365, %v2237
    %2239 = vdwg.mxu0
    %2240 = vmatpush.bf16.msra.mxu0 %v1325
    %2241 = vmatpush.bf16.msra.mxu0 %v1319
    %2242 = vmatpush.bf16.msra.mxu0 %v1313
    %2243 = vmatpush.bf16.msra.mxu0 %v1307
    %2244 = vmatpush.bf16.msra.mxu0 %v1301
    %2245 = vmatpush.bf16.msra.mxu0 %v1295
    %2246 = vmatpush.bf16.msra.mxu0 %v1289
    %2247 = vmatpush.bf16.msra.mxu0 %v1283
    %2248 = vmatmul.bf16.gmra.mxu0 %v31
    %v2249 = vpop.f32.mrf.mxu0
    %v2250 = vadd.f32 %v2236, %v2249
    %v2251 = vpop.f32.mrf.mxu0
    %v2252 = vadd.f32 %v2238, %v2251
    %2253 = vdwg.mxu0
    %2254 = vmatpush.bf16.msra.mxu0 %v1373
    %2255 = vmatpush.bf16.msra.mxu0 %v1367
    %2256 = vmatpush.bf16.msra.mxu0 %v1361
    %2257 = vmatpush.bf16.msra.mxu0 %v1355
    %2258 = vmatpush.bf16.msra.mxu0 %v1349
    %2259 = vmatpush.bf16.msra.mxu0 %v1343
    %2260 = vmatpush.bf16.msra.mxu0 %v1337
    %2261 = vmatpush.bf16.msra.mxu0 %v1331
    %2262 = vmatmul.bf16.gmra.mxu0 %v32
    %v2263 = vpop.f32.mrf.mxu0
    %v2264 = vadd.f32 %v2250, %v2263
    %v2265 = vpop.f32.mrf.mxu0
    %v2266 = vadd.f32 %v2252, %v2265
    %2267 = vdwg.mxu0
    %2268 = vmatpush.bf16.msra.mxu0 %v1421
    %2269 = vmatpush.bf16.msra.mxu0 %v1415
    %2270 = vmatpush.bf16.msra.mxu0 %v1409
    %2271 = vmatpush.bf16.msra.mxu0 %v1403
    %2272 = vmatpush.bf16.msra.mxu0 %v1397
    %2273 = vmatpush.bf16.msra.mxu0 %v1391
    %2274 = vmatpush.bf16.msra.mxu0 %v1385
    %2275 = vmatpush.bf16.msra.mxu0 %v1379
    %2276 = vmatmul.bf16.gmra.mxu0 %v33
    %v2277 = vpop.f32.mrf.mxu0
    %v2278 = vadd.f32 %v2264, %v2277
    %v2279 = vpop.f32.mrf.mxu0
    %v2280 = vadd.f32 %v2266, %v2279
    %2281 = vdwg.mxu0
    %2282 = vmatpush.bf16.msra.mxu0 %v1469
    %2283 = vmatpush.bf16.msra.mxu0 %v1463
    %2284 = vmatpush.bf16.msra.mxu0 %v1457
    %2285 = vmatpush.bf16.msra.mxu0 %v1451
    %2286 = vmatpush.bf16.msra.mxu0 %v1445
    %2287 = vmatpush.bf16.msra.mxu0 %v1439
    %2288 = vmatpush.bf16.msra.mxu0 %v1433
    %2289 = vmatpush.bf16.msra.mxu0 %v1427
    %2290 = vmatmul.bf16.gmra.mxu0 %v34
    %v2291 = vpop.f32.mrf.mxu0
    %v2292 = vadd.f32 %v2278, %v2291
    %v2293 = vpop.f32.mrf.mxu0
    %v2294 = vadd.f32 %v2280, %v2293
    %2295 = vdwg.mxu0
    %2296 = vmatpush.bf16.msra.mxu0 %v1517
    %2297 = vmatpush.bf16.msra.mxu0 %v1511
    %2298 = vmatpush.bf16.msra.mxu0 %v1505
    %2299 = vmatpush.bf16.msra.mxu0 %v1499
    %2300 = vmatpush.bf16.msra.mxu0 %v1493
    %2301 = vmatpush.bf16.msra.mxu0 %v1487
    %2302 = vmatpush.bf16.msra.mxu0 %v1481
    %2303 = vmatpush.bf16.msra.mxu0 %v1475
    %2304 = vmatmul.bf16.gmra.mxu0 %v35
    %v2305 = vpop.f32.mrf.mxu0
    %v2306 = vadd.f32 %v2292, %v2305
    %v2307 = vpop.f32.mrf.mxu0
    %v2308 = vadd.f32 %v2294, %v2307
    %2309 = vdwg.mxu0
    %v2310 = vadd.f32 %v1886, %v1970
    %v2311 = vadd.f32 %v2310, %v2054
    %v2312 = vadd.f32 %v2311, %v2138
    %v2313 = vadd.f32 %v2312, %v2222
    %v2314 = vadd.f32 %v2313, %v2306
    %2315 = vadd.xlane.f32.xlu0 %v2314
    %v2316 = vpop.xlane.xlu0 %2315
    %v2317 = vadd.f32 %v1888, %v1972
    %v2318 = vadd.f32 %v2317, %v2056
    %v2319 = vadd.f32 %v2318, %v2140
    %v2320 = vadd.f32 %v2319, %v2224
    %v2321 = vadd.f32 %v2320, %v2308
    %2322 = vadd.xlane.f32.xlu0 %v2321
    %v2323 = vpop.xlane.xlu0 %2322
    %v2324 = vrcp.pop 768.0
    %v2325 = vmul.f32 768.0, %v2324
    %v2326 = vsub.f32 1.0, %v2325
    %v2327 = vmul.f32 %v2324, %v2326
    %v2328 = vadd.f32 %v2324, %v2327
    %vm2329 = vweird.f32 %v2324
    %v2330 = vsel %vm2329, %v2324, %v2328
    %v2331 = vmul.f32 %v2316, %v2330
    %v2332 = vmul.f32 %v2323, %v2330
    %v2333 = vsub.f32 %v1886, %v2331
    %v2334 = vsub.f32 %v1970, %v2331
    %v2335 = vsub.f32 %v2054, %v2331
    %v2336 = vsub.f32 %v2138, %v2331
    %v2337 = vsub.f32 %v2222, %v2331
    %v2338 = vsub.f32 %v2306, %v2331
    %v2339 = vsub.f32 %v1888, %v2332
    %v2340 = vsub.f32 %v1972, %v2332
    %v2341 = vsub.f32 %v2056, %v2332
    %v2342 = vsub.f32 %v2140, %v2332
    %v2343 = vsub.f32 %v2224, %v2332
    %v2344 = vsub.f32 %v2308, %v2332
    %v2345 = vmul.f32 %v2333, %v2333
    %v2346 = vmul.f32 %v2334, %v2334
    %v2347 = vmul.f32 %v2335, %v2335
    %v2348 = vmul.f32 %v2336, %v2336
    %v2349 = vmul.f32 %v2337, %v2337
    %v2350 = vmul.f32 %v2338, %v2338
    %v2351 = vmul.f32 %v2339, %v2339
    %v2352 = vmul.f32 %v2340, %v2340
    %v2353 = vmul.f32 %v2341, %v2341
    %v2354 = vmul.f32 %v2342, %v2342
    %v2355 = vmul.f32 %v2343, %v2343
    %v2356 = vmul.f32 %v2344, %v2344
    %v2357 = vadd.f32 %v2345, %v2346
    %v2358 = vadd.f32 %v2357, %v2347
    %v2359 = vadd.f32 %v2358, %v2348
    %v2360 = vadd.f32 %v2359, %v2349
    %v2361 = vadd.f32 %v2360, %v2350
    %2362 = vadd.xlane.f32.xlu0 %v2361
    %v2363 = vpop.xlane.xlu0 %2362
    %v2364 = vadd.f32 %v2351, %v2352
    %v2365 = vadd.f32 %v2364, %v2353
    %v2366 = vadd.f32 %v2365, %v2354
    %v2367 = vadd.f32 %v2366, %v2355
    %v2368 = vadd.f32 %v2367, %v2356
    %2369 = vadd.xlane.f32.xlu0 %v2368
    %v2370 = vpop.xlane.xlu0 %2369
    %v2371 = vmul.f32 %v2363, %v2330
    %v2372 = vmul.f32 %v2370, %v2330
    %v2373 = vadd.f32 %v2371, 1e-12
    %v2374 = vadd.f32 %v2372, 1e-12
    %v2375 = vrsqrt.pop %v2373
    %v2376 = vmul.f32 %v2375, %v2373
    %v2377 = vmul.f32 %v2376, %v2375
    %v2378 = vmul.f32 0.5, %v2377
    %v2379 = vsub.f32 1.5, %v2378
    %v2380 = vmul.f32 %v2375, %v2379
    %vm2381 = vweird.f32 %v2373
    %vm2382 = vweird.f32 %v2375
    %vm2383 = vmor %vm2381, %vm2382
    %v2384 = vsel %vm2383, %v2375, %v2380
    %v2385 = vrsqrt.pop %v2374
    %v2386 = vmul.f32 %v2385, %v2374
    %v2387 = vmul.f32 %v2386, %v2385
    %v2388 = vmul.f32 0.5, %v2387
    %v2389 = vsub.f32 1.5, %v2388
    %v2390 = vmul.f32 %v2385, %v2389
    %vm2391 = vweird.f32 %v2374
    %vm2392 = vweird.f32 %v2385
    %vm2393 = vmor %vm2391, %vm2392
    %v2394 = vsel %vm2393, %v2385, %v2390
    %v2395 = vmul.f32 %v2333, %v2384
    %v2396 = vmul.f32 %v2334, %v2384
    %v2397 = vmul.f32 %v2335, %v2384
    %v2398 = vmul.f32 %v2336, %v2384
    %v2399 = vmul.f32 %v2337, %v2384
    %v2400 = vmul.f32 %v2338, %v2384
    %v2401 = vmul.f32 %v2339, %v2394
    %v2402 = vmul.f32 %v2340, %v2394
    %v2403 = vmul.f32 %v2341, %v2394
    %v2404 = vmul.f32 %v2342, %v2394
    %v2405 = vmul.f32 %v2343, %v2394
    %v2406 = vmul.f32 %v2344, %v2394
    %v2408 = vperm.slane %v326, 0
    %v2409 = vperm.slane %v326, 1
    %v2410 = vperm.slane %v326, 2
    %v2411 = vperm.slane %v326, 3
    %v2412 = vperm.slane %v326, 4
    %v2413 = vperm.slane %v326, 5
    %v2420 = vmul.f32 %v2408, %v2395
    %v2421 = vmul.f32 %v2409, %v2396
    %v2422 = vmul.f32 %v2410, %v2397
    %v2423 = vmul.f32 %v2411, %v2398
    %v2424 = vmul.f32 %v2412, %v2399
    %v2425 = vmul.f32 %v2413, %v2400
    %v2426 = vmul.f32 %v2408, %v2401
    %v2427 = vmul.f32 %v2409, %v2402
    %v2428 = vmul.f32 %v2410, %v2403
    %v2429 = vmul.f32 %v2411, %v2404
    %v2430 = vmul.f32 %v2412, %v2405
    %v2431 = vmul.f32 %v2413, %v2406
    %v2433 = vperm.slane %v328, 0
    %v2434 = vperm.slane %v328, 1
    %v2435 = vperm.slane %v328, 2
    %v2436 = vperm.slane %v328, 3
    %v2437 = vperm.slane %v328, 4
    %v2438 = vperm.slane %v328, 5
    %v2445 = vadd.f32 %v2420, %v2433
    %v2446 = vadd.f32 %v2421, %v2434
    %v2447 = vadd.f32 %v2422, %v2435
    %v2448 = vadd.f32 %v2423, %v2436
    %v2449 = vadd.f32 %v2424, %v2437
    %v2450 = vadd.f32 %v2425, %v2438
    %v2451 = vadd.f32 %v2426, %v2433
    %v2452 = vadd.f32 %v2427, %v2434
    %v2453 = vadd.f32 %v2428, %v2435
    %v2454 = vadd.f32 %v2429, %v2436
    %v2455 = vadd.f32 %v2430, %v2437
    %v2456 = vadd.f32 %v2431, %v2438
    %2457 = vst [vmem:[#allocation2] sm:$0xff] %v2445
    %2458 = vst [vmem:[#allocation2 + $0x8] sm:$0xff] %v2446
    %2459 = vst [vmem:[#allocation2 + $0x10] sm:$0xff] %v2447
    %2460 = vst [vmem:[#allocation2 + $0x18] sm:$0xff] %v2448
    %2461 = vst [vmem:[#allocation2 + $0x20] sm:$0xff] %v2449
    %2462 = vst [vmem:[#allocation2 + $0x28] sm:$0xff] %v2450
    %2463 = vst [vmem:[#allocation2 + $0x30] sm:$0xff] %v2451
    %2464 = vst [vmem:[#allocation2 + $0x38] sm:$0xff] %v2452
    %2465 = vst [vmem:[#allocation2 + $0x40] sm:$0xff] %v2453
    %2466 = vst [vmem:[#allocation2 + $0x48] sm:$0xff] %v2454
    %2467 = vst [vmem:[#allocation2 + $0x50] sm:$0xff] %v2455
    %2468 = vst [vmem:[#allocation2 + $0x58] sm:$0xff] %v2456
    // Predicated region
    $region18: #{bert_self_output.1} parent=1 // pred_check
      _
    $region19: #{bert_self_output.1} parent=1 // pred_check_branch
      %2470 = sbr.rel (0) target = $region21
    $region20: #{bert_self_output.1} parent=1 // pred_region
      %2472 = vsyncadd [#allocation3], 0
      %s2473 = sshll.u32 [#allocation2], 4
      %s2474 = int_to_ptr.vmem [resolvable:$true] %s2473
      %s2475 = sshll.u32 %s4, 4
      %s2476 = int_to_ptr.hbm [resolvable:$true] %s2475
      %2481 = dma.vmem_to_hbm [thread:$0]  %s2474, 1536, %s2476, [#allocation3], 768, 768, 48
    $region21: #{bert_self_output.1} parent=1 // pred_fallthru
      _
    // Predicated region
    $region22: #{bert_self_output.1} parent=1 // pred_check
      _
    $region23: #{bert_self_output.1} parent=1 // pred_check_branch
      %2483 = sbr.rel (0) target = $region25
    $region24: #{bert_self_output.1} parent=1 // pred_region
      %2485 = dma.done [#allocation3], 1536
    $region25: #{bert_self_output.1} parent=1 // pred_fallthru
      _
    %2486 = vsyncpa [#allocation3], 1

</llo_original>
